<compile_context>
chip_gen: v6e
topology: v6e:2x2x1
jax: 0.10.0
libtpu: 0.0.40
codegen_flags: <defaults>
</compile_context>

<pallas_src>
import jax
import jax.numpy as jnp
import numpy as np
from jax.experimental import pallas as pl
from jax.experimental.pallas import tpu as pltpu


def _round_down(x, m):
    return (x // m) * m


def _num_tensorcores():
    """Best-effort TensorCores-per-chip (v7x: 2, v5e/v6e: 1)."""
    try:
        info = pltpu.get_tpu_info()
        for attr in ("num_cores", "core_count", "tensorcores_per_chip"):
            v = getattr(info, attr, None)
            if v:
                return int(v)
    except Exception:
        pass
    try:
        kind = (getattr(jax.devices()[0], "device_kind", "") or "").lower()
        if "v7" in kind:
            return 2
    except Exception:
        pass
    return 1


def _vmem_capacity_bytes():
    try:
        return int(pltpu.get_tpu_info().vmem_capacity_bytes)
    except Exception:
        return 64 * 1024 * 1024  # v7x-safe lower bound


def _choose_tm(n_rows, num_cores, max_tm=2048):
    """Large row tile; multiple of 16 (bf16 sublane packing); never exceeds N."""
    if n_rows <= 16:
        return n_rows                                   # single full-extent block
    per_core = pl.cdiv(n_rows, max(num_cores, 1))
    tm = max(16, _round_down(per_core, 16))
    tm = min(tm, max_tm, _round_down(n_rows, 16))
    return tm


def _make_mlp_kernel(num_layers, compute_dtype):
    """Kernel over refs: (x_ref, w0, b0, w1, b1, ..., o_ref)."""

    def kernel(x_ref, *refs):
        o_ref = refs[-1]
        y = x_ref[...]                                   # bf16 row tile
        for l in range(num_layers):
            w = refs[2 * l][...]
            b = refs[2 * l + 1][...]
            acc = jnp.dot(y, w, preferred_element_type=jnp.float32)  # MXU, f32 acc
            acc = acc + b.astype(jnp.float32)            # (1, d) broadcasts over rows
            if l < num_layers - 1:
                acc = jnp.maximum(acc, 0.0)              # ReLU in f32
                y = acc.astype(compute_dtype)            # back to bf16 for next MXU
            else:
                y = acc                                  # final layer: no activation
        o_ref[...] = y.astype(o_ref.dtype)

    return kernel


def mlp_readout(x, weights, biases, *, compute_dtype=jnp.bfloat16, max_tm=2048):
    """MLPReadout forward.

    x:       (N, input_dim) float32
    weights: list of (in_l, out_l) float32 arrays (PyTorch weight transposed)
    biases:  list of (1, out_l) float32 arrays
    """
    n, d0 = x.shape
    dims = [d0] + [int(w.shape[1]) for w in weights]
    d_out = dims[-1]
    num_layers = len(weights)

    num_cores = _num_tensorcores()
    tm = _choose_tm(n, num_cores, max_tm)
    grid = pl.cdiv(n, tm)   # ragged last block handled by Pallas masking (no jnp.pad)

    # Narrow dtypes once at the HBM boundary; biases / accumulation stay f32.
    elt_c = np.dtype(compute_dtype).itemsize
    x_in = x.astype(compute_dtype)
    w_in = [w.astype(compute_dtype) for w in weights]
    b_in = [b.astype(jnp.float32) for b in biases]

    # --- block specs ---
    resident = pl.Buffered(1)  # weights/biases reused every step -> single buffer
    in_specs = [pl.BlockSpec((tm, d0), lambda i: (i, 0))]
    for w, b in zip(w_in, b_in):
        in_specs.append(
            pl.BlockSpec(w.shape, lambda i: (0, 0), pipeline_mode=resident))
        in_specs.append(
            pl.BlockSpec(b.shape, lambda i: (0, 0), pipeline_mode=resident))
    out_spec = pl.BlockSpec((tm, d_out), lambda i: (i, 0))

    # --- right-sized VMEM budget (v7x has only 64 MiB/TC; don't pin 60 MiB) ---
    x_bytes = 2 * tm * d0 * elt_c                         # double-buffered x tile
    out_bytes = 2 * tm * d_out * 4                        # double-buffered f32 out tile
    wb_bytes = (sum(int(w.size) * elt_c for w in w_in)
                + sum(int(b.size) * 4 for b in b_in))     # resident, single-buffered
    act_bytes = 2 * tm * max(dims) * 4                    # f32 intermediates
    vmem_budget = int(1.25 * (x_bytes + out_bytes + wb_bytes + act_bytes)) + (4 << 20)
    vmem_budget = max(vmem_budget, 16 << 20)
    vmem_budget = min(vmem_budget, int(0.75 * _vmem_capacity_bytes()))

    # --- cost estimate for XLA scheduling around the custom call ---
    flops = 2 * n * sum(a * b for a, b in zip(dims[:-1], dims[1:]))
    bytes_accessed = n * d0 * elt_c + n * d_out * 4 + wb_bytes
    cost = pl.CostEstimate(flops=int(flops), transcendentals=0,
                           bytes_accessed=int(bytes_accessed))

    args = [x_in]
    for w, b in zip(w_in, b_in):
        args += [w, b]

    return pl.pallas_call(
        _make_mlp_kernel(num_layers, compute_dtype),
        out_shape=jax.ShapeDtypeStruct((n, d_out), jnp.float32),
        grid_spec=pltpu.PrefetchScalarGridSpec(
            num_scalar_prefetch=0,
            grid=(grid,),
            in_specs=in_specs,
            out_specs=out_spec,
        ),
        compiler_params=pltpu.CompilerParams(
            dimension_semantics=("parallel",),   # shard row blocks across TCs (v7x)
            vmem_limit_bytes=vmem_budget,
        ),
        cost_estimate=cost,
    )(*args)


def mlp_readout_ref(x, weights, biases, compute_dtype=jnp.bfloat16):
    """Pure-JAX reference with the same bf16-input / f32-accumulate numerics."""
    y = x.astype(compute_dtype)
    for l, (w, b) in enumerate(zip(weights, biases)):
        y = jnp.dot(y, w.astype(compute_dtype),
                    preferred_element_type=jnp.float32) + b.astype(jnp.float32)
        if l < len(weights) - 1:
            y = jnp.maximum(y, 0.0).astype(compute_dtype)
    return y


if __name__ == "__main__":
    # Small shapes consistent with the module: N rows, input_dim, output_dim, L=2.
    # N deliberately NOT a tile multiple -> exercises the ragged-block path that
    # replaced the wrapper-side padding.
    N, input_dim, output_dim, L = 200, 256, 32, 2

    key = jax.random.PRNGKey(0)
    keys = jax.random.split(key, 2 * (L + 1) + 1)

    x = jax.random.normal(keys[0], (N, input_dim), dtype=jnp.float32)

    # Layer widths: input_dim -> input_dim/2 -> input_dim/4 -> output_dim.
    dims = [input_dim // (2 ** l) for l in range(L + 1)] + [output_dim]

    weights, biases = [], []
    for l in range(L + 1):
        fan_in, fan_out = dims[l], dims[l + 1]
        bound = 1.0 / np.sqrt(fan_in)               # nn.Linear default init bound
        w_pt = jax.random.uniform(keys[1 + 2 * l], (fan_out, fan_in),
                                  minval=-bound, maxval=bound, dtype=jnp.float32)
        b = jax.random.uniform(keys[2 + 2 * l], (1, fan_out),
                               minval=-bound, maxval=bound, dtype=jnp.float32)
        weights.append(w_pt.T)                      # (in, out) for y @ W
        biases.append(b)

    # TODO(synk): self.bn (BatchNorm1d) exists in __init__ but is unused in forward -> omitted.
    out = jax.block_until_ready(mlp_readout(x, weights, biases))

    ref = mlp_readout_ref(x, weights, biases)
    np.testing.assert_allclose(np.asarray(out), np.asarray(ref),
                               rtol=2e-2, atol=2e-2)
    print("KERNEL_OK")
</pallas_src>

<mosaic_0001>
module attributes {stable_mosaic.version = 11 : i64} {
  func.func @kernel(%arg0: i32, %arg1: memref<192x256xbf16, #tpu.memory_space<vmem>>, %arg2: memref<256x128xbf16, #tpu.memory_space<vmem>>, %arg3: memref<1x128xf32, #tpu.memory_space<vmem>>, %arg4: memref<128x64xbf16, #tpu.memory_space<vmem>>, %arg5: memref<1x64xf32, #tpu.memory_space<vmem>>, %arg6: memref<64x32xbf16, #tpu.memory_space<vmem>>, %arg7: memref<1x32xf32, #tpu.memory_space<vmem>>, %arg8: memref<192x32xf32, #tpu.memory_space<vmem>>) attributes {dimension_semantics = [#tpu.dimension_semantics<parallel>], iteration_bounds = array<i64: 2>, scalar_prefetch = 0 : i64, scratch_operands = 0 : i64, tpu.core_type = #tpu.core_type<tc>, window_params = [{transform_indices = @transform_0, window_bounds = array<i64: 192, 256>}, {pipeline_mode = #tpu.pipeline_mode<synchronous>, transform_indices = @transform_1, window_bounds = array<i64: 256, 128>}, {pipeline_mode = #tpu.pipeline_mode<synchronous>, transform_indices = @transform_2, window_bounds = array<i64: 1, 128>}, {pipeline_mode = #tpu.pipeline_mode<synchronous>, transform_indices = @transform_3, window_bounds = array<i64: 128, 64>}, {pipeline_mode = #tpu.pipeline_mode<synchronous>, transform_indices = @transform_4, window_bounds = array<i64: 1, 64>}, {pipeline_mode = #tpu.pipeline_mode<synchronous>, transform_indices = @transform_5, window_bounds = array<i64: 64, 32>}, {pipeline_mode = #tpu.pipeline_mode<synchronous>, transform_indices = @transform_6, window_bounds = array<i64: 1, 32>}, {transform_indices = @transform_7, window_bounds = array<i64: 192, 32>}]} {
    %c0 = arith.constant 0 : index
    %c0_0 = arith.constant 0 : index
    %0 = vector.load %arg1[%c0, %c0_0] : memref<192x256xbf16, #tpu.memory_space<vmem>>, vector<192x256xbf16>
    %c0_1 = arith.constant 0 : index
    %c0_2 = arith.constant 0 : index
    %1 = vector.load %arg2[%c0_1, %c0_2] : memref<256x128xbf16, #tpu.memory_space<vmem>>, vector<256x128xbf16>
    %c0_3 = arith.constant 0 : index
    %c0_4 = arith.constant 0 : index
    %2 = vector.load %arg3[%c0_3, %c0_4] : memref<1x128xf32, #tpu.memory_space<vmem>>, vector<1x128xf32>
    %cst = arith.constant dense<0.000000e+00> : vector<192x128xf32>
    %3 = tpu.matmul %0, %1, %cst {dimension_numbers = #tpu.dot_dimension_numbers<[1], [0], [0], [1], [0, 0, 1, 1], [], []>} : vector<192x256xbf16>, vector<256x128xbf16>, vector<192x128xf32> -> vector<192x128xf32>
    %4 = vector.broadcast %2 : vector<1x128xf32> to vector<192x128xf32>
    %5 = arith.addf %3, %4 : vector<192x128xf32>
    %cst_5 = arith.constant 0.000000e+00 : f32
    %6 = vector.broadcast %cst_5 : f32 to vector<192x128xf32>
    %7 = arith.maximumf %5, %6 : vector<192x128xf32>
    %8 = arith.truncf %7 : vector<192x128xf32> to vector<192x128xbf16>
    %c0_6 = arith.constant 0 : index
    %c0_7 = arith.constant 0 : index
    %9 = vector.load %arg4[%c0_6, %c0_7] : memref<128x64xbf16, #tpu.memory_space<vmem>>, vector<128x64xbf16>
    %c0_8 = arith.constant 0 : index
    %c0_9 = arith.constant 0 : index
    %10 = vector.load %arg5[%c0_8, %c0_9] : memref<1x64xf32, #tpu.memory_space<vmem>>, vector<1x64xf32>
    %cst_10 = arith.constant dense<0.000000e+00> : vector<192x64xf32>
    %11 = tpu.matmul %8, %9, %cst_10 {dimension_numbers = #tpu.dot_dimension_numbers<[1], [0], [0], [1], [0, 0, 1, 1], [], []>} : vector<192x128xbf16>, vector<128x64xbf16>, vector<192x64xf32> -> vector<192x64xf32>
    %12 = vector.broadcast %10 : vector<1x64xf32> to vector<192x64xf32>
    %13 = arith.addf %11, %12 : vector<192x64xf32>
    %cst_11 = arith.constant 0.000000e+00 : f32
    %14 = vector.broadcast %cst_11 : f32 to vector<192x64xf32>
    %15 = arith.maximumf %13, %14 : vector<192x64xf32>
    %16 = arith.truncf %15 : vector<192x64xf32> to vector<192x64xbf16>
    %c0_12 = arith.constant 0 : index
    %c0_13 = arith.constant 0 : index
    %17 = vector.load %arg6[%c0_12, %c0_13] : memref<64x32xbf16, #tpu.memory_space<vmem>>, vector<64x32xbf16>
    %c0_14 = arith.constant 0 : index
    %c0_15 = arith.constant 0 : index
    %18 = vector.load %arg7[%c0_14, %c0_15] : memref<1x32xf32, #tpu.memory_space<vmem>>, vector<1x32xf32>
    %cst_16 = arith.constant dense<0.000000e+00> : vector<192x32xf32>
    %19 = tpu.matmul %16, %17, %cst_16 {dimension_numbers = #tpu.dot_dimension_numbers<[1], [0], [0], [1], [0, 0, 1, 1], [], []>} : vector<192x64xbf16>, vector<64x32xbf16>, vector<192x32xf32> -> vector<192x32xf32>
    %20 = vector.broadcast %18 : vector<1x32xf32> to vector<192x32xf32>
    %21 = arith.addf %19, %20 : vector<192x32xf32>
    %c0_17 = arith.constant 0 : index
    %c0_18 = arith.constant 0 : index
    %22 = vector.load %arg8[%c0_17, %c0_18] : memref<192x32xf32, #tpu.memory_space<vmem>>, vector<192x32xf32>
    tpu.vector_store %arg8[%c0_17, %c0_18], %21 {strides = array<i32>} : memref<192x32xf32, #tpu.memory_space<vmem>>, vector<192x32xf32>,
    return
  }
  func.func @transform_0(%arg0: i32) -> (i32, i32) {
    %c0_i32 = arith.constant 0 : i32
    %c0_i32_0 = arith.constant 0 : i32
    return %arg0, %c0_i32 : i32, i32
  }
  func.func @transform_1(%arg0: i32) -> (i32, i32) {
    %c0_i32 = arith.constant 0 : i32
    %c0_i32_0 = arith.constant 0 : i32
    %c0_i32_1 = arith.constant 0 : i32
    return %c0_i32, %c0_i32_0 : i32, i32
  }
  func.func @transform_2(%arg0: i32) -> (i32, i32) {
    %c0_i32 = arith.constant 0 : i32
    %c0_i32_0 = arith.constant 0 : i32
    %c0_i32_1 = arith.constant 0 : i32
    return %c0_i32, %c0_i32_0 : i32, i32
  }
  func.func @transform_3(%arg0: i32) -> (i32, i32) {
    %c0_i32 = arith.constant 0 : i32
    %c0_i32_0 = arith.constant 0 : i32
    %c0_i32_1 = arith.constant 0 : i32
    return %c0_i32, %c0_i32_0 : i32, i32
  }
  func.func @transform_4(%arg0: i32) -> (i32, i32) {
    %c0_i32 = arith.constant 0 : i32
    %c0_i32_0 = arith.constant 0 : i32
    %c0_i32_1 = arith.constant 0 : i32
    return %c0_i32, %c0_i32_0 : i32, i32
  }
  func.func @transform_5(%arg0: i32) -> (i32, i32) {
    %c0_i32 = arith.constant 0 : i32
    %c0_i32_0 = arith.constant 0 : i32
    %c0_i32_1 = arith.constant 0 : i32
    return %c0_i32, %c0_i32_0 : i32, i32
  }
  func.func @transform_6(%arg0: i32) -> (i32, i32) {
    %c0_i32 = arith.constant 0 : i32
    %c0_i32_0 = arith.constant 0 : i32
    %c0_i32_1 = arith.constant 0 : i32
    return %c0_i32, %c0_i32_0 : i32, i32
  }
  func.func @transform_7(%arg0: i32) -> (i32, i32) {
    %c0_i32 = arith.constant 0 : i32
    %c0_i32_0 = arith.constant 0 : i32
    return %arg0, %c0_i32 : i32, i32
  }
}

</mosaic_0001>

<llo_original>
// kernel: tpu_custom_call.1
$region0: #{tpu_custom_call.1}
  #allocation0 [shape = 'u32[]', space=smem, size = 0x4, offset = 0x4, fixed_abs, tag = 'smem constant byte address 0x4 - core index']
  #allocation1 [shape = 'u32[144,128]{1,0:T(1,128)}', space=vmem, size = 0x12000, scoped, tag = 'internal scratch']
  %s0 = inlined_call_operand.hbm [shape: bf16[200,256], index: 0, kind: input, shape index: {}]
  %s1 = inlined_call_operand.vmem [shape: bf16[256,128], index: 1, kind: input, shape index: {}]
  %s2 = inlined_call_operand.vmem [shape: f32[1,128], index: 2, kind: input, shape index: {}]
  %s3 = inlined_call_operand.vmem [shape: bf16[128,64], index: 3, kind: input, shape index: {}]
  %s4 = inlined_call_operand.vmem [shape: f32[1,64], index: 4, kind: input, shape index: {}]
  %s5 = inlined_call_operand.vmem [shape: bf16[64,32], index: 5, kind: input, shape index: {}]
  %s6 = inlined_call_operand.vmem [shape: f32[1,32], index: 6, kind: input, shape index: {}]
  %s7 = inlined_call_operand.vmem [shape: f32[200,32], index: 7, kind: output, shape index: {}]
  %s8 = sld [smem:[#allocation0]]
  $region113: #{tpu_custom_call.1} parent=0
    _
  %s10 = ssub.s32 1, %s8
  %s11 = scalar_select 0, %s10, %s8
  $region1: #{tpu_custom_call.1} parent=0
    #allocation2 [shape = 'u8[196608]{0}', space=vmem, size = 0x30000, scoped, tag = 'input window, operand 0']
    #allocation3 [shape = 's32[2]{0}', space=sflag, size = 0x8, scoped, tag = 'scoped memory for tpu_custom_call.1']
    #allocation4 [shape = 'u8[196608]{0}', space=vmem, size = 0x30000, scoped, tag = 'output window, operand 0']
    %12 = vsyncpa [#allocation3], 0
    %s13 = scalar_lea.sflag [#allocation3], 1
    %14 = vsyncpa %s13, 0
    loop: start=0, step=1, limit=4
    $region2: #{tpu_custom_call.1} parent=1 // loop_pre_header
      _
    $region3: #{tpu_custom_call.1} parent=1 // loop_header
      %s16 = sphi 0, %s20
      %p17 = scmp.ge.s32.totalorder %s16, 4
      %s26 = sphi 0, %s28
      %s29 = sphi 0, %s26
      %s30 = sphi 0, %s29
      %s46 = sphi 0, %s30
      %s50 = sphi 0, %s50
      %s52 = sphi 0, %s50
      %s53 = sphi 0, %s52
      %s67 = sphi 0, %s53
      %s71 = sphi 0, %s71
      %s73 = sphi 0, %s71
      %s74 = sphi 0, %s73
      %s88 = sphi 0, %s74
      %s92 = sphi 0, %s92
      %s94 = sphi 0, %s92
      %s95 = sphi 0, %s94
      %s109 = sphi 0, %s95
      %s113 = sphi 0, %s113
      %s115 = sphi 0, %s113
      %s116 = sphi 0, %s115
      %s130 = sphi 0, %s116
      %s134 = sphi 0, %s134
      %s136 = sphi 0, %s134
      %s137 = sphi 0, %s136
      %s151 = sphi 0, %s137
      %s155 = sphi 0, %s155
      %s157 = sphi 0, %s155
      %s158 = sphi 0, %s157
      %s172 = sphi 0, %s158
      %s178 = sphi 0, %s180
      %s181 = sphi 0, %s178
      %s182 = sphi 0, %s181
      %s198 = sphi 0, %s182
    $region4: #{tpu_custom_call.1} parent=1 // loop_header_branch
      %19 = sbr.rel (%p17) target = $region8
    $region5: #{tpu_custom_call.1} parent=1 // loop_body
      %s21 = ssub.s32 %s16, 1
      %s22 = ssub.s32 %s16, 2
      %s23 = sadd.s32 %s16, 1
      %s24 = ssub.s32 %s16, %s23
      %p25 = scmp.eq.s32.totalorder %s24, 0
      %s27 = sadd.s32 %s26, 1
      %s28 = scalar_select %p25, %s26, %s27
      %p31 = pneg %p25
      %p32 = scmp.eq.s32.totalorder %s16, 1
      %p33 = por %p31, %p32
      %p34 = scmp.ne.s32.totalorder %s26, %s29
      %p35 = scmp.eq.s32.totalorder %s16, 0
      %p36 = por %p34, %p35
      %p37 = scmp.ne.s32.totalorder %s26, %s29
      %p38 = scmp.eq.s32.totalorder %s21, 1
      %p39 = por %p37, %p38
      %p40 = scmp.ne.s32.totalorder %s29, %s30
      %p41 = scmp.eq.s32.totalorder %s21, 0
      %p42 = por %p40, %p41
      %p43 = scmp.ne.s32.totalorder %s29, %s30
      %p44 = scmp.eq.s32.totalorder %s22, 1
      %p45 = por %p43, %p44
      %p47 = scmp.ne.s32.totalorder %s30, %s46
      %p48 = scmp.eq.s32.totalorder %s22, 0
      %p49 = por %p47, %p48
      %s51 = sadd.s32 %s50, 1
      %p54 = scmp.eq.s32.totalorder %s16, 1
      %p55 = scmp.ne.s32.totalorder %s50, %s52
      %p56 = scmp.eq.s32.totalorder %s16, 0
      %p57 = por %p55, %p56
      %p58 = scmp.ne.s32.totalorder %s50, %s52
      %p59 = scmp.eq.s32.totalorder %s21, 1
      %p60 = por %p58, %p59
      %p61 = scmp.ne.s32.totalorder %s52, %s53
      %p62 = scmp.eq.s32.totalorder %s21, 0
      %p63 = por %p61, %p62
      %p64 = scmp.ne.s32.totalorder %s52, %s53
      %p65 = scmp.eq.s32.totalorder %s22, 1
      %p66 = por %p64, %p65
      %p68 = scmp.ne.s32.totalorder %s53, %s67
      %p69 = scmp.eq.s32.totalorder %s22, 0
      %p70 = por %p68, %p69
      %s72 = sadd.s32 %s71, 1
      %p75 = scmp.eq.s32.totalorder %s16, 1
      %p76 = scmp.ne.s32.totalorder %s71, %s73
      %p77 = scmp.eq.s32.totalorder %s16, 0
      %p78 = por %p76, %p77
      %p79 = scmp.ne.s32.totalorder %s71, %s73
      %p80 = scmp.eq.s32.totalorder %s21, 1
      %p81 = por %p79, %p80
      %p82 = scmp.ne.s32.totalorder %s73, %s74
      %p83 = scmp.eq.s32.totalorder %s21, 0
      %p84 = por %p82, %p83
      %p85 = scmp.ne.s32.totalorder %s73, %s74
      %p86 = scmp.eq.s32.totalorder %s22, 1
      %p87 = por %p85, %p86
      %p89 = scmp.ne.s32.totalorder %s74, %s88
      %p90 = scmp.eq.s32.totalorder %s22, 0
      %p91 = por %p89, %p90
      %s93 = sadd.s32 %s92, 1
      %p96 = scmp.eq.s32.totalorder %s16, 1
      %p97 = scmp.ne.s32.totalorder %s92, %s94
      %p98 = scmp.eq.s32.totalorder %s16, 0
      %p99 = por %p97, %p98
      %p100 = scmp.ne.s32.totalorder %s92, %s94
      %p101 = scmp.eq.s32.totalorder %s21, 1
      %p102 = por %p100, %p101
      %p103 = scmp.ne.s32.totalorder %s94, %s95
      %p104 = scmp.eq.s32.totalorder %s21, 0
      %p105 = por %p103, %p104
      %p106 = scmp.ne.s32.totalorder %s94, %s95
      %p107 = scmp.eq.s32.totalorder %s22, 1
      %p108 = por %p106, %p107
      %p110 = scmp.ne.s32.totalorder %s95, %s109
      %p111 = scmp.eq.s32.totalorder %s22, 0
      %p112 = por %p110, %p111
      %s114 = sadd.s32 %s113, 1
      %p117 = scmp.eq.s32.totalorder %s16, 1
      %p118 = scmp.ne.s32.totalorder %s113, %s115
      %p119 = scmp.eq.s32.totalorder %s16, 0
      %p120 = por %p118, %p119
      %p121 = scmp.ne.s32.totalorder %s113, %s115
      %p122 = scmp.eq.s32.totalorder %s21, 1
      %p123 = por %p121, %p122
      %p124 = scmp.ne.s32.totalorder %s115, %s116
      %p125 = scmp.eq.s32.totalorder %s21, 0
      %p126 = por %p124, %p125
      %p127 = scmp.ne.s32.totalorder %s115, %s116
      %p128 = scmp.eq.s32.totalorder %s22, 1
      %p129 = por %p127, %p128
      %p131 = scmp.ne.s32.totalorder %s116, %s130
      %p132 = scmp.eq.s32.totalorder %s22, 0
      %p133 = por %p131, %p132
      %s135 = sadd.s32 %s134, 1
      %p138 = scmp.eq.s32.totalorder %s16, 1
      %p139 = scmp.ne.s32.totalorder %s134, %s136
      %p140 = scmp.eq.s32.totalorder %s16, 0
      %p141 = por %p139, %p140
      %p142 = scmp.ne.s32.totalorder %s134, %s136
      %p143 = scmp.eq.s32.totalorder %s21, 1
      %p144 = por %p142, %p143
      %p145 = scmp.ne.s32.totalorder %s136, %s137
      %p146 = scmp.eq.s32.totalorder %s21, 0
      %p147 = por %p145, %p146
      %p148 = scmp.ne.s32.totalorder %s136, %s137
      %p149 = scmp.eq.s32.totalorder %s22, 1
      %p150 = por %p148, %p149
      %p152 = scmp.ne.s32.totalorder %s137, %s151
      %p153 = scmp.eq.s32.totalorder %s22, 0
      %p154 = por %p152, %p153
      %s156 = sadd.s32 %s155, 1
      %p159 = scmp.eq.s32.totalorder %s16, 1
      %p160 = scmp.ne.s32.totalorder %s155, %s157
      %p161 = scmp.eq.s32.totalorder %s16, 0
      %p162 = por %p160, %p161
      %p163 = scmp.ne.s32.totalorder %s155, %s157
      %p164 = scmp.eq.s32.totalorder %s21, 1
      %p165 = por %p163, %p164
      %p166 = scmp.ne.s32.totalorder %s157, %s158
      %p167 = scmp.eq.s32.totalorder %s21, 0
      %p168 = por %p166, %p167
      %p169 = scmp.ne.s32.totalorder %s157, %s158
      %p170 = scmp.eq.s32.totalorder %s22, 1
      %p171 = por %p169, %p170
      %p173 = scmp.ne.s32.totalorder %s158, %s172
      %p174 = scmp.eq.s32.totalorder %s22, 0
      %p175 = por %p173, %p174
      %s176 = ssub.s32 %s16, %s23
      %p177 = scmp.eq.s32.totalorder %s176, 0
      %s179 = sadd.s32 %s178, 1
      %s180 = scalar_select %p177, %s178, %s179
      %p183 = pneg %p177
      %p184 = scmp.eq.s32.totalorder %s16, 1
      %p185 = por %p183, %p184
      %p186 = scmp.ne.s32.totalorder %s178, %s181
      %p187 = scmp.eq.s32.totalorder %s16, 0
      %p188 = por %p186, %p187
      %p189 = scmp.ne.s32.totalorder %s178, %s181
      %p190 = scmp.eq.s32.totalorder %s21, 1
      %p191 = por %p189, %p190
      %p192 = scmp.ne.s32.totalorder %s181, %s182
      %p193 = scmp.eq.s32.totalorder %s21, 0
      %p194 = por %p192, %p193
      %p195 = scmp.ne.s32.totalorder %s181, %s182
      %p196 = scmp.eq.s32.totalorder %s22, 1
      %p197 = por %p195, %p196
      %p199 = scmp.ne.s32.totalorder %s182, %s198
      %p200 = scmp.eq.s32.totalorder %s22, 0
      %p201 = por %p199, %p200
      %p202 = scmp.le.s32.totalorder 1, %s16
      %p203 = scmp.lt.s32.totalorder %s16, 3
      %p204 = pnand %p202, %p203
      %p205 = pneg %p204
      // Predicated region
      $region9: #{tpu_custom_call.1} parent=5 // pred_check
        _
      $region10: #{tpu_custom_call.1} parent=5 // pred_check_branch
        %207 = sbr.rel (%p204) target = $region12
      $region11: #{tpu_custom_call.1} parent=5 // pred_region
        %s208 = ssub.s32 %s16, 1
        // Predicated region
        $region13: #{tpu_custom_call.1} parent=11 // pred_check
          %p209 = pneg %p63
        $region14: #{tpu_custom_call.1} parent=11 // pred_check_branch
          %211 = sbr.rel (%p209) target = $region16
        $region15: #{tpu_custom_call.1} parent=11 // pred_region
          _
        $region16: #{tpu_custom_call.1} parent=11 // pred_fallthru
          _
        // Predicated region
        $region17: #{tpu_custom_call.1} parent=11 // pred_check
          %p212 = pneg %p84
        $region18: #{tpu_custom_call.1} parent=11 // pred_check_branch
          %214 = sbr.rel (%p212) target = $region20
        $region19: #{tpu_custom_call.1} parent=11 // pred_region
          _
        $region20: #{tpu_custom_call.1} parent=11 // pred_fallthru
          _
        // Predicated region
        $region21: #{tpu_custom_call.1} parent=11 // pred_check
          %p215 = pneg %p105
        $region22: #{tpu_custom_call.1} parent=11 // pred_check_branch
          %217 = sbr.rel (%p215) target = $region24
        $region23: #{tpu_custom_call.1} parent=11 // pred_region
          _
        $region24: #{tpu_custom_call.1} parent=11 // pred_fallthru
          _
        // Predicated region
        $region25: #{tpu_custom_call.1} parent=11 // pred_check
          %p218 = pneg %p126
        $region26: #{tpu_custom_call.1} parent=11 // pred_check_branch
          %220 = sbr.rel (%p218) target = $region28
        $region27: #{tpu_custom_call.1} parent=11 // pred_region
          _
        $region28: #{tpu_custom_call.1} parent=11 // pred_fallthru
          _
        // Predicated region
        $region29: #{tpu_custom_call.1} parent=11 // pred_check
          %p221 = pneg %p147
        $region30: #{tpu_custom_call.1} parent=11 // pred_check_branch
          %223 = sbr.rel (%p221) target = $region32
        $region31: #{tpu_custom_call.1} parent=11 // pred_region
          _
        $region32: #{tpu_custom_call.1} parent=11 // pred_fallthru
          _
        // Predicated region
        $region33: #{tpu_custom_call.1} parent=11 // pred_check
          %p224 = pneg %p168
        $region34: #{tpu_custom_call.1} parent=11 // pred_check_branch
          %226 = sbr.rel (%p224) target = $region36
        $region35: #{tpu_custom_call.1} parent=11 // pred_region
          _
        $region36: #{tpu_custom_call.1} parent=11 // pred_fallthru
          _
      $region12: #{tpu_custom_call.1} parent=5 // pred_fallthru
        _
      %p227 = scmp.lt.s32.totalorder %s16, 2
      // Predicated region
      $region37: #{tpu_custom_call.1} parent=5 // pred_check
        %p228 = pneg %p227
      $region38: #{tpu_custom_call.1} parent=5 // pred_check_branch
        %230 = sbr.rel (%p228) target = $region40
      $region39: #{tpu_custom_call.1} parent=5 // pred_region
        // Predicated region
        $region41: #{tpu_custom_call.1} parent=39 // pred_check
          %p231 = pneg %p36
        $region42: #{tpu_custom_call.1} parent=39 // pred_check_branch
          %233 = sbr.rel (%p231) target = $region44
        $region43: #{tpu_custom_call.1} parent=39 // pred_region
          %s234 = sand.u32 %s26, 1
          %s235 = scalar_lea.sflag [#allocation3], %s234
          %s236 = sand.u32 %s26, 1
          %s237 = smul.addr %s236, 192
          %s238 = scalar_lea.vmem [#allocation2], %s237
          %s239 = smul.u32 24, %s16
          %s240 = ssub.s32 25, %s239
          %p241 = scmp.lt.s32.totalorder %s240, 24
          %s242 = scalar_select %p241, %s240, 24
          %s243 = smul.u32 64, %s242
          %s244 = smul.u32 %s243, 2
          %s246 = ssub.s32 3072, %s244
          %247 = vsyncadd %s235, %s246
          %p248 = scmp.ne.s32.totalorder 0, %s244
          %s249 = smul.addr %s239, 2
          %s250 = smul.addr %s249, 64
          %s251 = scalar_lea.hbm %s0, %s250
          %s252 = smul.u32 8, %s242
          %s253 = sshll.u32 %s238, 4
          %s254 = int_to_ptr.vmem [resolvable:$true] %s253
          %s255 = sshll.u32 %s252, 4
          %259 = dma.hbm_to_vmem [thread:$0]  (%p248), %s251, %s255, %s254, %s235, 128, 128, 8
        $region44: #{tpu_custom_call.1} parent=39 // pred_fallthru
          _
      $region40: #{tpu_custom_call.1} parent=5 // pred_fallthru
        _
      %p260 = scmp.le.s32.totalorder 1, %s16
      %p261 = scmp.lt.s32.totalorder %s16, 3
      %p262 = pnand %p260, %p261
      %p263 = pneg %p262
      // Predicated region
      $region45: #{tpu_custom_call.1} parent=5 // pred_check
        _
      $region46: #{tpu_custom_call.1} parent=5 // pred_check_branch
        %265 = sbr.rel (%p262) target = $region48
      $region47: #{tpu_custom_call.1} parent=5 // pred_region
        %s266 = ssub.s32 %s16, 1
        %s267 = sand.u32 %s29, 1
        %s268 = scalar_lea.sflag [#allocation3], %s267
        %s269 = sand.u32 %s29, 1
        %s270 = smul.addr %s269, 192
        %s271 = scalar_lea.vmem [#allocation2], %s270
        // Predicated region
        $region49: #{tpu_custom_call.1} parent=47 // pred_check
          %p272 = pneg %p42
        $region50: #{tpu_custom_call.1} parent=47 // pred_check_branch
          %274 = sbr.rel (%p272) target = $region52
        $region51: #{tpu_custom_call.1} parent=47 // pred_region
          %275 = dma.done %s268, 3072
        $region52: #{tpu_custom_call.1} parent=47 // pred_fallthru
          _
        %s276 = sand.u32 %s29, 1
        %s277 = scalar_lea.sflag [#allocation3], %s276
        %s278 = sand.u32 %s29, 1
        %s279 = smul.addr %s278, 192
        %s280 = scalar_lea.vmem [#allocation2], %s279
        %p281 = pneg %p42
        %p282 = pneg %p39
        %p283 = pneg %p63
        %p284 = pneg %p60
        %p285 = pneg %p84
        %p286 = pneg %p81
        %p287 = pneg %p105
        %p288 = pneg %p102
        %p289 = pneg %p126
        %p290 = pneg %p123
        %p291 = pneg %p147
        %p292 = pneg %p144
        %p293 = pneg %p168
        %p294 = pneg %p165
        %p295 = pneg %p194
        %p296 = pneg %p191
        %s297 = sand.u32 %s181, 1
        %s298 = sand.u32 %s181, 1
        %s299 = smul.addr %s298, 192
        %s300 = scalar_lea.vmem [#allocation4], %s299
        %s301 = smul.u32 24, %s21
        %s302 = ssub.s32 25, %s301
        %p303 = scmp.lt.s32.totalorder %s302, 24
        %s304 = scalar_select %p303, %s302, 24
        %s305 = smul.u32 64, %s304
        %s306 = smul.u32 %s305, 2
        %s307 = smul.u32 24, %s21
        %s308 = ssub.s32 25, %s307
        %p309 = scmp.lt.s32.totalorder %s308, 24
        %s310 = scalar_select %p309, %s308, 24
        %s311 = smul.u32 128, %s310
        %v313 = vld [vmem:[%s271] sm:$0xff]
        %v314 = vld [vmem:[%s271 + $0x8] sm:$0xff]
        %v315 = vld [vmem:[%s271 + $0x10] sm:$0xff]
        %v316 = vld [vmem:[%s271 + $0x18] sm:$0xff]
        %v317 = vld [vmem:[%s271 + $0x20] sm:$0xff]
        %v318 = vld [vmem:[%s271 + $0x28] sm:$0xff]
        %v319 = vld [vmem:[%s271 + $0x30] sm:$0xff]
        %v320 = vld [vmem:[%s271 + $0x38] sm:$0xff]
        %v321 = vld [vmem:[%s271 + $0x40] sm:$0xff]
        %v322 = vld [vmem:[%s271 + $0x48] sm:$0xff]
        %v323 = vld [vmem:[%s271 + $0x50] sm:$0xff]
        %v324 = vld [vmem:[%s271 + $0x58] sm:$0xff]
        %v325 = vld [vmem:[%s271 + $0x60] sm:$0xff]
        %v326 = vld [vmem:[%s271 + $0x68] sm:$0xff]
        %v327 = vld [vmem:[%s271 + $0x70] sm:$0xff]
        %v328 = vld [vmem:[%s271 + $0x78] sm:$0xff]
        %v329 = vld [vmem:[%s271 + $0x80] sm:$0xff]
        %v330 = vld [vmem:[%s271 + $0x88] sm:$0xff]
        %v331 = vld [vmem:[%s271 + $0x90] sm:$0xff]
        %v332 = vld [vmem:[%s271 + $0x98] sm:$0xff]
        %v333 = vld [vmem:[%s271 + $0xa0] sm:$0xff]
        %v334 = vld [vmem:[%s271 + $0xa8] sm:$0xff]
        %v335 = vld [vmem:[%s271 + $0xb0] sm:$0xff]
        %v336 = vld [vmem:[%s271 + $0xb8] sm:$0xff]
        %v337 = vld [vmem:[%s1] sm:$0xf]
        %v338 = vld [vmem:[%s1 + $0x4] sm:$0xf]
        %v339 = vld [vmem:[%s1 + $0x8] sm:$0xf]
        %v340 = vld [vmem:[%s1 + $0xc] sm:$0xf]
        %v341 = vld [vmem:[%s1 + $0x10] sm:$0xf]
        %v342 = vld [vmem:[%s1 + $0x14] sm:$0xf]
        %v343 = vld [vmem:[%s1 + $0x18] sm:$0xf]
        %v344 = vld [vmem:[%s1 + $0x1c] sm:$0xf]
        %v345 = vld [vmem:[%s1 + $0x20] sm:$0xf]
        %v346 = vld [vmem:[%s1 + $0x24] sm:$0xf]
        %v347 = vld [vmem:[%s1 + $0x28] sm:$0xf]
        %v348 = vld [vmem:[%s1 + $0x2c] sm:$0xf]
        %v349 = vld [vmem:[%s1 + $0x30] sm:$0xf]
        %v350 = vld [vmem:[%s1 + $0x34] sm:$0xf]
        %v351 = vld [vmem:[%s1 + $0x38] sm:$0xf]
        %v352 = vld [vmem:[%s1 + $0x3c] sm:$0xf]
        %v353 = vld [vmem:[%s1 + $0x40] sm:$0xf]
        %v354 = vld [vmem:[%s1 + $0x44] sm:$0xf]
        %v355 = vld [vmem:[%s1 + $0x48] sm:$0xf]
        %v356 = vld [vmem:[%s1 + $0x4c] sm:$0xf]
        %v357 = vld [vmem:[%s1 + $0x50] sm:$0xf]
        %v358 = vld [vmem:[%s1 + $0x54] sm:$0xf]
        %v359 = vld [vmem:[%s1 + $0x58] sm:$0xf]
        %v360 = vld [vmem:[%s1 + $0x5c] sm:$0xf]
        %v361 = vld [vmem:[%s1 + $0x60] sm:$0xf]
        %v362 = vld [vmem:[%s1 + $0x64] sm:$0xf]
        %v363 = vld [vmem:[%s1 + $0x68] sm:$0xf]
        %v364 = vld [vmem:[%s1 + $0x6c] sm:$0xf]
        %v365 = vld [vmem:[%s1 + $0x70] sm:$0xf]
        %v366 = vld [vmem:[%s1 + $0x74] sm:$0xf]
        %v367 = vld [vmem:[%s1 + $0x78] sm:$0xf]
        %v368 = vld [vmem:[%s1 + $0x7c] sm:$0xf]
        %v369 = vld [vmem:[%s2] sm:$0x1]
        %v371 = vlaneseq
        %v372 = vshrl.u32 %v371, 7
        %v373 = vsub.s32 0, %v372
        %v374 = vrot.slane %v369, %v373
        %v400 = vunpack.c.l.b16 %v313
        %v401 = vunpack.c.h.b16 %v313
        %v402 = vunpack.c.l.b16 %v314
        %v403 = vunpack.c.h.b16 %v314
        %v404 = vunpack.c.l.b16 %v315
        %v405 = vunpack.c.h.b16 %v315
        %v406 = vunpack.c.l.b16 %v316
        %v407 = vunpack.c.h.b16 %v316
        %v408 = vunpack.c.l.b16 %v317
        %v409 = vunpack.c.h.b16 %v317
        %v410 = vunpack.c.l.b16 %v318
        %v411 = vunpack.c.h.b16 %v318
        %v412 = vunpack.c.l.b16 %v319
        %v413 = vunpack.c.h.b16 %v319
        %v414 = vunpack.c.l.b16 %v320
        %v415 = vunpack.c.h.b16 %v320
        %v416 = vunpack.c.l.b16 %v321
        %v417 = vunpack.c.h.b16 %v321
        %v418 = vunpack.c.l.b16 %v322
        %v419 = vunpack.c.h.b16 %v322
        %v420 = vunpack.c.l.b16 %v323
        %v421 = vunpack.c.h.b16 %v323
        %v422 = vunpack.c.l.b16 %v324
        %v423 = vunpack.c.h.b16 %v324
        %v424 = vunpack.c.l.b16 %v325
        %v425 = vunpack.c.h.b16 %v325
        %v426 = vunpack.c.l.b16 %v326
        %v427 = vunpack.c.h.b16 %v326
        %v428 = vunpack.c.l.b16 %v327
        %v429 = vunpack.c.h.b16 %v327
        %v430 = vunpack.c.l.b16 %v328
        %v431 = vunpack.c.h.b16 %v328
        %v432 = vunpack.c.l.b16 %v329
        %v433 = vunpack.c.h.b16 %v329
        %v434 = vunpack.c.l.b16 %v330
        %v435 = vunpack.c.h.b16 %v330
        %v436 = vunpack.c.l.b16 %v331
        %v437 = vunpack.c.h.b16 %v331
        %v438 = vunpack.c.l.b16 %v332
        %v439 = vunpack.c.h.b16 %v332
        %v440 = vunpack.c.l.b16 %v333
        %v441 = vunpack.c.h.b16 %v333
        %v442 = vunpack.c.l.b16 %v334
        %v443 = vunpack.c.h.b16 %v334
        %v444 = vunpack.c.l.b16 %v335
        %v445 = vunpack.c.h.b16 %v335
        %v446 = vunpack.c.l.b16 %v336
        %v447 = vunpack.c.h.b16 %v336
        %v448 = vpack.c.b16 %v402, %v400
        %v449 = vpack.c.b16 %v403, %v401
        %v450 = vpack.c.b16 %v406, %v404
        %v451 = vpack.c.b16 %v407, %v405
        %v452 = vpack.c.b16 %v410, %v408
        %v453 = vpack.c.b16 %v411, %v409
        %v454 = vpack.c.b16 %v414, %v412
        %v455 = vpack.c.b16 %v415, %v413
        %v456 = vpack.c.b16 %v418, %v416
        %v457 = vpack.c.b16 %v419, %v417
        %v458 = vpack.c.b16 %v422, %v420
        %v459 = vpack.c.b16 %v423, %v421
        %v460 = vpack.c.b16 %v426, %v424
        %v461 = vpack.c.b16 %v427, %v425
        %v462 = vpack.c.b16 %v430, %v428
        %v463 = vpack.c.b16 %v431, %v429
        %v464 = vpack.c.b16 %v434, %v432
        %v465 = vpack.c.b16 %v435, %v433
        %v466 = vpack.c.b16 %v438, %v436
        %v467 = vpack.c.b16 %v439, %v437
        %v468 = vpack.c.b16 %v442, %v440
        %v469 = vpack.c.b16 %v443, %v441
        %v470 = vpack.c.b16 %v446, %v444
        %v471 = vpack.c.b16 %v447, %v445
        %v528 = vunpack.c.l.b16 %v337
        %v529 = vunpack.c.l.b16 %v338
        %v530 = vunpack.c.l.b16 %v339
        %v531 = vunpack.c.l.b16 %v340
        %v532 = vunpack.c.l.b16 %v341
        %v533 = vunpack.c.l.b16 %v342
        %v534 = vunpack.c.l.b16 %v343
        %v535 = vunpack.c.l.b16 %v344
        %v536 = vunpack.c.l.b16 %v345
        %v537 = vunpack.c.l.b16 %v346
        %v538 = vunpack.c.l.b16 %v347
        %v539 = vunpack.c.l.b16 %v348
        %v540 = vunpack.c.l.b16 %v349
        %v541 = vunpack.c.l.b16 %v350
        %v542 = vunpack.c.l.b16 %v351
        %v543 = vunpack.c.l.b16 %v352
        %v544 = vunpack.c.l.b16 %v353
        %v545 = vunpack.c.l.b16 %v354
        %v546 = vunpack.c.l.b16 %v355
        %v547 = vunpack.c.l.b16 %v356
        %v548 = vunpack.c.l.b16 %v357
        %v549 = vunpack.c.l.b16 %v358
        %v550 = vunpack.c.l.b16 %v359
        %v551 = vunpack.c.l.b16 %v360
        %v552 = vunpack.c.l.b16 %v361
        %v553 = vunpack.c.l.b16 %v362
        %v554 = vunpack.c.l.b16 %v363
        %v555 = vunpack.c.l.b16 %v364
        %v556 = vunpack.c.l.b16 %v365
        %v557 = vunpack.c.l.b16 %v366
        %v558 = vunpack.c.l.b16 %v367
        %v559 = vunpack.c.l.b16 %v368
        %v560 = vpack.c.b16 %v529, %v528
        %v561 = vpack.c.b16 %v531, %v530
        %v562 = vpack.c.b16 %v533, %v532
        %v563 = vpack.c.b16 %v535, %v534
        %v564 = vpack.c.b16 %v537, %v536
        %v565 = vpack.c.b16 %v539, %v538
        %v566 = vpack.c.b16 %v541, %v540
        %v567 = vpack.c.b16 %v543, %v542
        %v568 = vpack.c.b16 %v545, %v544
        %v569 = vpack.c.b16 %v547, %v546
        %v570 = vpack.c.b16 %v549, %v548
        %v571 = vpack.c.b16 %v551, %v550
        %v572 = vpack.c.b16 %v553, %v552
        %v573 = vpack.c.b16 %v555, %v554
        %v574 = vpack.c.b16 %v557, %v556
        %v575 = vpack.c.b16 %v559, %v558
        %592 = vmatprep.subr.bf16.mxu0 0
        %593 = vmatpush1.bf16.msra.mxu0 %v567
        %594 = vmatprep.subr.bf16.mxu0 0
        %595 = vmatpush1.bf16.msra.mxu0 %v566
        %596 = vmatprep.subr.bf16.mxu0 0
        %597 = vmatpush1.bf16.msra.mxu0 %v565
        %598 = vmatprep.subr.bf16.mxu0 0
        %599 = vmatpush1.bf16.msra.mxu0 %v564
        %600 = vmatprep.subr.bf16.mxu0 0
        %601 = vmatpush1.bf16.msra.mxu0 %v563
        %602 = vmatprep.subr.bf16.mxu0 0
        %603 = vmatpush1.bf16.msra.mxu0 %v562
        %604 = vmatprep.subr.bf16.mxu0 0
        %605 = vmatpush1.bf16.msra.mxu0 %v561
        %606 = vmatprep.subr.bf16.mxu0 0
        %607 = vmatpush1.bf16.msra.mxu0 %v560
        %608 = vmatprep.subr.bf16.mxu0 0
        %609 = vmatpush2.bf16.msra.mxu0 %v575
        %610 = vmatprep.subr.bf16.mxu0 0
        %611 = vmatpush2.bf16.msra.mxu0 %v574
        %612 = vmatprep.subr.bf16.mxu0 0
        %613 = vmatpush2.bf16.msra.mxu0 %v573
        %614 = vmatprep.subr.bf16.mxu0 0
        %615 = vmatpush2.bf16.msra.mxu0 %v572
        %616 = vmatprep.subr.bf16.mxu0 0
        %617 = vmatpush2.bf16.msra.mxu0 %v571
        %618 = vmatprep.subr.bf16.mxu0 0
        %619 = vmatpush2.bf16.msra.mxu0 %v570
        %620 = vmatprep.subr.bf16.mxu0 0
        %621 = vmatpush2.bf16.msra.mxu0 %v569
        %622 = vmatprep.subr.bf16.mxu0 0
        %623 = vmatpush2.bf16.msra.mxu0 %v568
        %624 = vmatprep.mubr.bf16.mxu0 %v449
        %625 = vmatmul.mubr.bf16.gmra.mxu0 %v448
        %v626 = vpop.f32.mrf.mxu0
        %v627 = vadd.f32 %v374, %v626
        %v628 = vpop.f32.mrf.mxu0
        %v629 = vpop.f32.mrf.mxu0
        %v630 = vadd.f32 %v374, %v629
        %v631 = vpop.f32.mrf.mxu0
        %632 = vmatprep.mubr.bf16.mxu0 %v451
        %633 = vmatmul.mubr.bf16.gmra.mxu0 %v450
        %v634 = vpop.f32.mrf.mxu0
        %v635 = vadd.f32 %v374, %v634
        %v636 = vpop.f32.mrf.mxu0
        %v637 = vpop.f32.mrf.mxu0
        %v638 = vadd.f32 %v374, %v637
        %v639 = vpop.f32.mrf.mxu0
        %640 = vmatprep.mubr.bf16.mxu0 %v453
        %641 = vmatmul.mubr.bf16.gmra.mxu0 %v452
        %v642 = vpop.f32.mrf.mxu0
        %v643 = vadd.f32 %v374, %v642
        %v644 = vpop.f32.mrf.mxu0
        %v645 = vpop.f32.mrf.mxu0
        %v646 = vadd.f32 %v374, %v645
        %v647 = vpop.f32.mrf.mxu0
        %648 = vmatprep.mubr.bf16.mxu0 %v455
        %649 = vmatmul.mubr.bf16.gmra.mxu0 %v454
        %v650 = vpop.f32.mrf.mxu0
        %v651 = vadd.f32 %v374, %v650
        %v652 = vpop.f32.mrf.mxu0
        %v653 = vpop.f32.mrf.mxu0
        %v654 = vadd.f32 %v374, %v653
        %v655 = vpop.f32.mrf.mxu0
        %656 = vmatprep.mubr.bf16.mxu0 %v457
        %657 = vmatmul.mubr.bf16.gmra.mxu0 %v456
        %v658 = vpop.f32.mrf.mxu0
        %v659 = vadd.f32 %v374, %v658
        %v660 = vpop.f32.mrf.mxu0
        %v661 = vpop.f32.mrf.mxu0
        %v662 = vadd.f32 %v374, %v661
        %v663 = vpop.f32.mrf.mxu0
        %664 = vmatprep.mubr.bf16.mxu0 %v459
        %665 = vmatmul.mubr.bf16.gmra.mxu0 %v458
        %v666 = vpop.f32.mrf.mxu0
        %v667 = vadd.f32 %v374, %v666
        %v668 = vpop.f32.mrf.mxu0
        %v669 = vpop.f32.mrf.mxu0
        %v670 = vadd.f32 %v374, %v669
        %v671 = vpop.f32.mrf.mxu0
        %672 = vmatprep.mubr.bf16.mxu0 %v461
        %673 = vmatmul.mubr.bf16.gmra.mxu0 %v460
        %v674 = vpop.f32.mrf.mxu0
        %v675 = vadd.f32 %v374, %v674
        %v676 = vpop.f32.mrf.mxu0
        %v677 = vpop.f32.mrf.mxu0
        %v678 = vadd.f32 %v374, %v677
        %v679 = vpop.f32.mrf.mxu0
        %680 = vmatprep.mubr.bf16.mxu0 %v463
        %681 = vmatmul.mubr.bf16.gmra.mxu0 %v462
        %v682 = vpop.f32.mrf.mxu0
        %v683 = vadd.f32 %v374, %v682
        %v684 = vpop.f32.mrf.mxu0
        %v685 = vpop.f32.mrf.mxu0
        %v686 = vadd.f32 %v374, %v685
        %v687 = vpop.f32.mrf.mxu0
        %688 = vmatprep.mubr.bf16.mxu0 %v465
        %689 = vmatmul.mubr.bf16.gmra.mxu0 %v464
        %v690 = vpop.f32.mrf.mxu0
        %v691 = vadd.f32 %v374, %v690
        %v692 = vpop.f32.mrf.mxu0
        %v693 = vpop.f32.mrf.mxu0
        %v694 = vadd.f32 %v374, %v693
        %v695 = vpop.f32.mrf.mxu0
        %696 = vmatprep.mubr.bf16.mxu0 %v467
        %697 = vmatmul.mubr.bf16.gmra.mxu0 %v466
        %v698 = vpop.f32.mrf.mxu0
        %v699 = vadd.f32 %v374, %v698
        %v700 = vpop.f32.mrf.mxu0
        %v701 = vpop.f32.mrf.mxu0
        %v702 = vadd.f32 %v374, %v701
        %v703 = vpop.f32.mrf.mxu0
        %704 = vmatprep.mubr.bf16.mxu0 %v469
        %705 = vmatmul.mubr.bf16.gmra.mxu0 %v468
        %v706 = vpop.f32.mrf.mxu0
        %v707 = vadd.f32 %v374, %v706
        %v708 = vpop.f32.mrf.mxu0
        %v709 = vpop.f32.mrf.mxu0
        %v710 = vadd.f32 %v374, %v709
        %v711 = vpop.f32.mrf.mxu0
        %712 = vmatprep.mubr.bf16.mxu0 %v471
        %713 = vmatmul.mubr.bf16.gmra.mxu0 %v470
        %v714 = vpop.f32.mrf.mxu0
        %v715 = vadd.f32 %v374, %v714
        %v716 = vpop.f32.mrf.mxu0
        %v717 = vpop.f32.mrf.mxu0
        %v718 = vadd.f32 %v374, %v717
        %v719 = vpop.f32.mrf.mxu0
        %720 = vdwg.mxu0
        %v721 = vmax.f32 %v627, 0.0
        %v722 = vmax.f32 %v630, 0.0
        %v723 = vmax.f32 %v635, 0.0
        %v724 = vmax.f32 %v638, 0.0
        %v725 = vmax.f32 %v643, 0.0
        %v726 = vmax.f32 %v646, 0.0
        %v727 = vmax.f32 %v651, 0.0
        %v728 = vmax.f32 %v654, 0.0
        %v729 = vmax.f32 %v659, 0.0
        %v730 = vmax.f32 %v662, 0.0
        %v731 = vmax.f32 %v667, 0.0
        %v732 = vmax.f32 %v670, 0.0
        %v733 = vmax.f32 %v675, 0.0
        %v734 = vmax.f32 %v678, 0.0
        %v735 = vmax.f32 %v683, 0.0
        %v736 = vmax.f32 %v686, 0.0
        %v737 = vmax.f32 %v691, 0.0
        %v738 = vmax.f32 %v694, 0.0
        %v739 = vmax.f32 %v699, 0.0
        %v740 = vmax.f32 %v702, 0.0
        %v741 = vmax.f32 %v707, 0.0
        %v742 = vmax.f32 %v710, 0.0
        %v743 = vmax.f32 %v715, 0.0
        %v744 = vmax.f32 %v718, 0.0
        %v745 = vpack.c.bf16 %v722, %v721
        %v746 = vpack.c.bf16 %v724, %v723
        %v747 = vpack.c.bf16 %v726, %v725
        %v748 = vpack.c.bf16 %v728, %v727
        %v749 = vpack.c.bf16 %v730, %v729
        %v750 = vpack.c.bf16 %v732, %v731
        %v751 = vpack.c.bf16 %v734, %v733
        %v752 = vpack.c.bf16 %v736, %v735
        %v753 = vpack.c.bf16 %v738, %v737
        %v754 = vpack.c.bf16 %v740, %v739
        %v755 = vpack.c.bf16 %v742, %v741
        %v756 = vpack.c.bf16 %v744, %v743
        %v757 = vld [vmem:[%s3] sm:$0xf]
        %v758 = vld [vmem:[%s3 + $0x4] sm:$0xf]
        %v759 = vld [vmem:[%s3 + $0x8] sm:$0xf]
        %v760 = vld [vmem:[%s3 + $0xc] sm:$0xf]
        %v761 = vld [vmem:[%s3 + $0x10] sm:$0xf]
        %v762 = vld [vmem:[%s3 + $0x14] sm:$0xf]
        %v763 = vld [vmem:[%s3 + $0x18] sm:$0xf]
        %v764 = vld [vmem:[%s3 + $0x1c] sm:$0xf]
        %v765 = vld [vmem:[%s3 + $0x20] sm:$0xf]
        %v766 = vld [vmem:[%s3 + $0x24] sm:$0xf]
        %v767 = vld [vmem:[%s3 + $0x28] sm:$0xf]
        %v768 = vld [vmem:[%s3 + $0x2c] sm:$0xf]
        %v769 = vld [vmem:[%s3 + $0x30] sm:$0xf]
        %v770 = vld [vmem:[%s3 + $0x34] sm:$0xf]
        %v771 = vld [vmem:[%s3 + $0x38] sm:$0xf]
        %v772 = vld [vmem:[%s3 + $0x3c] sm:$0xf]
        %v773 = vld [vmem:[%s4] sm:$0x1]
        %v775 = vlaneseq
        %v776 = vshrl.u32 %v775, 7
        %v777 = vsub.s32 0, %v776
        %v778 = vrot.slane %v773, %v777
        %v796 = vunpack.c.l.b16 %v757
        %v797 = vunpack.c.l.b16 %v758
        %v798 = vunpack.c.l.b16 %v759
        %v799 = vunpack.c.l.b16 %v760
        %v800 = vunpack.c.l.b16 %v761
        %v801 = vunpack.c.l.b16 %v762
        %v802 = vunpack.c.l.b16 %v763
        %v803 = vunpack.c.l.b16 %v764
        %v804 = vunpack.c.l.b16 %v765
        %v805 = vunpack.c.l.b16 %v766
        %v806 = vunpack.c.l.b16 %v767
        %v807 = vunpack.c.l.b16 %v768
        %v808 = vunpack.c.l.b16 %v769
        %v809 = vunpack.c.l.b16 %v770
        %v810 = vunpack.c.l.b16 %v771
        %v811 = vunpack.c.l.b16 %v772
        %v812 = vpack.c.b16 %v797, %v796
        %v813 = vpack.c.b16 %v799, %v798
        %v814 = vpack.c.b16 %v801, %v800
        %v815 = vpack.c.b16 %v803, %v802
        %v816 = vpack.c.b16 %v805, %v804
        %v817 = vpack.c.b16 %v807, %v806
        %v818 = vpack.c.b16 %v809, %v808
        %v819 = vpack.c.b16 %v811, %v810
        %828 = vmatprep.subr.bf16.mxu0 0
        %829 = vmatpush1.bf16.msra.mxu0 %v819
        %830 = vmatprep.subr.bf16.mxu0 0
        %831 = vmatpush1.bf16.msra.mxu0 %v818
        %832 = vmatprep.subr.bf16.mxu0 0
        %833 = vmatpush1.bf16.msra.mxu0 %v817
        %834 = vmatprep.subr.bf16.mxu0 0
        %835 = vmatpush1.bf16.msra.mxu0 %v816
        %836 = vmatprep.subr.bf16.mxu0 0
        %837 = vmatpush1.bf16.msra.mxu0 %v815
        %838 = vmatprep.subr.bf16.mxu0 0
        %839 = vmatpush1.bf16.msra.mxu0 %v814
        %840 = vmatprep.subr.bf16.mxu0 0
        %841 = vmatpush1.bf16.msra.mxu0 %v813
        %842 = vmatprep.subr.bf16.mxu0 0
        %843 = vmatpush1.bf16.msra.mxu0 %v812
        %844 = vmatprep.subr.bf16.mxu0 0
        %845 = vmatpush2.bf16.msra.mxu0 0
        %846 = vmatprep.subr.bf16.mxu0 0
        %847 = vmatpush2.bf16.msra.mxu0 0
        %848 = vmatprep.subr.bf16.mxu0 0
        %849 = vmatpush2.bf16.msra.mxu0 0
        %850 = vmatprep.subr.bf16.mxu0 0
        %851 = vmatpush2.bf16.msra.mxu0 0
        %852 = vmatprep.subr.bf16.mxu0 0
        %853 = vmatpush2.bf16.msra.mxu0 0
        %854 = vmatprep.subr.bf16.mxu0 0
        %855 = vmatpush2.bf16.msra.mxu0 0
        %856 = vmatprep.subr.bf16.mxu0 0
        %857 = vmatpush2.bf16.msra.mxu0 0
        %858 = vmatprep.subr.bf16.mxu0 0
        %859 = vmatpush2.bf16.msra.mxu0 0
        %860 = vmatprep.mubr.bf16.mxu0 0
        %861 = vmatmul.mubr.bf16.gmra.mxu0 %v745
        %v862 = vpop.f32.mrf.mxu0
        %v863 = vadd.f32 %v778, %v862
        %v864 = vpop.f32.mrf.mxu0
        %v865 = vpop.f32.mrf.mxu0
        %v866 = vadd.f32 %v778, %v865
        %v867 = vpop.f32.mrf.mxu0
        %868 = vmatprep.mubr.bf16.mxu0 0
        %869 = vmatmul.mubr.bf16.gmra.mxu0 %v746
        %v870 = vpop.f32.mrf.mxu0
        %v871 = vadd.f32 %v778, %v870
        %v872 = vpop.f32.mrf.mxu0
        %v873 = vpop.f32.mrf.mxu0
        %v874 = vadd.f32 %v778, %v873
        %v875 = vpop.f32.mrf.mxu0
        %876 = vmatprep.mubr.bf16.mxu0 0
        %877 = vmatmul.mubr.bf16.gmra.mxu0 %v747
        %v878 = vpop.f32.mrf.mxu0
        %v879 = vadd.f32 %v778, %v878
        %v880 = vpop.f32.mrf.mxu0
        %v881 = vpop.f32.mrf.mxu0
        %v882 = vadd.f32 %v778, %v881
        %v883 = vpop.f32.mrf.mxu0
        %884 = vmatprep.mubr.bf16.mxu0 0
        %885 = vmatmul.mubr.bf16.gmra.mxu0 %v748
        %v886 = vpop.f32.mrf.mxu0
        %v887 = vadd.f32 %v778, %v886
        %v888 = vpop.f32.mrf.mxu0
        %v889 = vpop.f32.mrf.mxu0
        %v890 = vadd.f32 %v778, %v889
        %v891 = vpop.f32.mrf.mxu0
        %892 = vmatprep.mubr.bf16.mxu0 0
        %893 = vmatmul.mubr.bf16.gmra.mxu0 %v749
        %v894 = vpop.f32.mrf.mxu0
        %v895 = vadd.f32 %v778, %v894
        %v896 = vpop.f32.mrf.mxu0
        %v897 = vpop.f32.mrf.mxu0
        %v898 = vadd.f32 %v778, %v897
        %v899 = vpop.f32.mrf.mxu0
        %900 = vmatprep.mubr.bf16.mxu0 0
        %901 = vmatmul.mubr.bf16.gmra.mxu0 %v750
        %v902 = vpop.f32.mrf.mxu0
        %v903 = vadd.f32 %v778, %v902
        %v904 = vpop.f32.mrf.mxu0
        %v905 = vpop.f32.mrf.mxu0
        %v906 = vadd.f32 %v778, %v905
        %v907 = vpop.f32.mrf.mxu0
        %908 = vmatprep.mubr.bf16.mxu0 0
        %909 = vmatmul.mubr.bf16.gmra.mxu0 %v751
        %v910 = vpop.f32.mrf.mxu0
        %v911 = vadd.f32 %v778, %v910
        %v912 = vpop.f32.mrf.mxu0
        %v913 = vpop.f32.mrf.mxu0
        %v914 = vadd.f32 %v778, %v913
        %v915 = vpop.f32.mrf.mxu0
        %916 = vmatprep.mubr.bf16.mxu0 0
        %917 = vmatmul.mubr.bf16.gmra.mxu0 %v752
        %v918 = vpop.f32.mrf.mxu0
        %v919 = vadd.f32 %v778, %v918
        %v920 = vpop.f32.mrf.mxu0
        %v921 = vpop.f32.mrf.mxu0
        %v922 = vadd.f32 %v778, %v921
        %v923 = vpop.f32.mrf.mxu0
        %924 = vmatprep.mubr.bf16.mxu0 0
        %925 = vmatmul.mubr.bf16.gmra.mxu0 %v753
        %v926 = vpop.f32.mrf.mxu0
        %v927 = vadd.f32 %v778, %v926
        %v928 = vpop.f32.mrf.mxu0
        %v929 = vpop.f32.mrf.mxu0
        %v930 = vadd.f32 %v778, %v929
        %v931 = vpop.f32.mrf.mxu0
        %932 = vmatprep.mubr.bf16.mxu0 0
        %933 = vmatmul.mubr.bf16.gmra.mxu0 %v754
        %v934 = vpop.f32.mrf.mxu0
        %v935 = vadd.f32 %v778, %v934
        %v936 = vpop.f32.mrf.mxu0
        %v937 = vpop.f32.mrf.mxu0
        %v938 = vadd.f32 %v778, %v937
        %v939 = vpop.f32.mrf.mxu0
        %940 = vmatprep.mubr.bf16.mxu0 0
        %941 = vmatmul.mubr.bf16.gmra.mxu0 %v755
        %v942 = vpop.f32.mrf.mxu0
        %v943 = vadd.f32 %v778, %v942
        %v944 = vpop.f32.mrf.mxu0
        %v945 = vpop.f32.mrf.mxu0
        %v946 = vadd.f32 %v778, %v945
        %v947 = vpop.f32.mrf.mxu0
        %948 = vmatprep.mubr.bf16.mxu0 0
        %949 = vmatmul.mubr.bf16.gmra.mxu0 %v756
        %v950 = vpop.f32.mrf.mxu0
        %v951 = vadd.f32 %v778, %v950
        %v952 = vpop.f32.mrf.mxu0
        %v953 = vpop.f32.mrf.mxu0
        %v954 = vadd.f32 %v778, %v953
        %v955 = vpop.f32.mrf.mxu0
        %956 = vdwg.mxu0
        %v957 = vmax.f32 %v863, 0.0
        %v958 = vmax.f32 %v866, 0.0
        %v959 = vmax.f32 %v871, 0.0
        %v960 = vmax.f32 %v874, 0.0
        %v961 = vmax.f32 %v879, 0.0
        %v962 = vmax.f32 %v882, 0.0
        %v963 = vmax.f32 %v887, 0.0
        %v964 = vmax.f32 %v890, 0.0
        %v965 = vmax.f32 %v895, 0.0
        %v966 = vmax.f32 %v898, 0.0
        %v967 = vmax.f32 %v903, 0.0
        %v968 = vmax.f32 %v906, 0.0
        %v969 = vmax.f32 %v911, 0.0
        %v970 = vmax.f32 %v914, 0.0
        %v971 = vmax.f32 %v919, 0.0
        %v972 = vmax.f32 %v922, 0.0
        %v973 = vmax.f32 %v927, 0.0
        %v974 = vmax.f32 %v930, 0.0
        %v975 = vmax.f32 %v935, 0.0
        %v976 = vmax.f32 %v938, 0.0
        %v977 = vmax.f32 %v943, 0.0
        %v978 = vmax.f32 %v946, 0.0
        %v979 = vmax.f32 %v951, 0.0
        %v980 = vmax.f32 %v954, 0.0
        %v981 = vpack.c.bf16 %v958, %v957
        %v982 = vpack.c.bf16 %v960, %v959
        %v983 = vpack.c.bf16 %v962, %v961
        %v984 = vpack.c.bf16 %v964, %v963
        %v985 = vpack.c.bf16 %v966, %v965
        %v986 = vpack.c.bf16 %v968, %v967
        %v987 = vpack.c.bf16 %v970, %v969
        %v988 = vpack.c.bf16 %v972, %v971
        %v989 = vpack.c.bf16 %v974, %v973
        %v990 = vpack.c.bf16 %v976, %v975
        %v991 = vpack.c.bf16 %v978, %v977
        %v992 = vpack.c.bf16 %v980, %v979
        %v993 = vld [vmem:[%s5] sm:$0xf]
        %v994 = vld [vmem:[%s5 + $0x4] sm:$0xf]
        %v995 = vld [vmem:[%s5 + $0x8] sm:$0xf]
        %v996 = vld [vmem:[%s5 + $0xc] sm:$0xf]
        %v997 = vld [vmem:[%s5 + $0x10] sm:$0xf]
        %v998 = vld [vmem:[%s5 + $0x14] sm:$0xf]
        %v999 = vld [vmem:[%s5 + $0x18] sm:$0xf]
        %v1000 = vld [vmem:[%s5 + $0x1c] sm:$0xf]
        %v1001 = vld [vmem:[%s6] sm:$0x1]
        %v1003 = vlaneseq
        %v1004 = vshrl.u32 %v1003, 7
        %v1005 = vsub.s32 0, %v1004
        %v1006 = vrot.slane %v1001, %v1005
        %v1016 = vunpack.c.l.b16 %v993
        %v1017 = vunpack.c.l.b16 %v994
        %v1018 = vunpack.c.l.b16 %v995
        %v1019 = vunpack.c.l.b16 %v996
        %v1020 = vunpack.c.l.b16 %v997
        %v1021 = vunpack.c.l.b16 %v998
        %v1022 = vunpack.c.l.b16 %v999
        %v1023 = vunpack.c.l.b16 %v1000
        %v1024 = vpack.c.b16 %v1017, %v1016
        %v1025 = vpack.c.b16 %v1019, %v1018
        %v1026 = vpack.c.b16 %v1021, %v1020
        %v1027 = vpack.c.b16 %v1023, %v1022
        %vm1032 = vcmask 523264
        %v1034 = vsel %vm1032, %v981, 0
        %v1037 = vsel %vm1032, %v982, 0
        %v1040 = vsel %vm1032, %v983, 0
        %v1043 = vsel %vm1032, %v984, 0
        %v1046 = vsel %vm1032, %v985, 0
        %v1049 = vsel %vm1032, %v986, 0
        %v1052 = vsel %vm1032, %v987, 0
        %v1055 = vsel %vm1032, %v988, 0
        %v1058 = vsel %vm1032, %v989, 0
        %v1061 = vsel %vm1032, %v990, 0
        %v1064 = vsel %vm1032, %v991, 0
        %v1067 = vsel %vm1032, %v992, 0
        %1069 = vmatprep.subr.bf16.mxu0 0
        %1070 = vmatpush1.bf16.msra.mxu0 0
        %1071 = vmatprep.subr.bf16.mxu0 0
        %1072 = vmatpush1.bf16.msra.mxu0 0
        %1073 = vmatprep.subr.bf16.mxu0 0
        %1074 = vmatpush1.bf16.msra.mxu0 0
        %1075 = vmatprep.subr.bf16.mxu0 0
        %1076 = vmatpush1.bf16.msra.mxu0 0
        %1077 = vmatprep.subr.bf16.mxu0 0
        %1078 = vmatpush1.bf16.msra.mxu0 %v1027
        %1079 = vmatprep.subr.bf16.mxu0 0
        %1080 = vmatpush1.bf16.msra.mxu0 %v1026
        %1081 = vmatprep.subr.bf16.mxu0 0
        %1082 = vmatpush1.bf16.msra.mxu0 %v1025
        %1083 = vmatprep.subr.bf16.mxu0 0
        %1084 = vmatpush1.bf16.msra.mxu0 %v1024
        %1085 = vmatprep.subr.bf16.mxu0 0
        %1086 = vmatpush2.bf16.msra.mxu0 0
        %1087 = vmatprep.subr.bf16.mxu0 0
        %1088 = vmatpush2.bf16.msra.mxu0 0
        %1089 = vmatprep.subr.bf16.mxu0 0
        %1090 = vmatpush2.bf16.msra.mxu0 0
        %1091 = vmatprep.subr.bf16.mxu0 0
        %1092 = vmatpush2.bf16.msra.mxu0 0
        %1093 = vmatprep.subr.bf16.mxu0 0
        %1094 = vmatpush2.bf16.msra.mxu0 0
        %1095 = vmatprep.subr.bf16.mxu0 0
        %1096 = vmatpush2.bf16.msra.mxu0 0
        %1097 = vmatprep.subr.bf16.mxu0 0
        %1098 = vmatpush2.bf16.msra.mxu0 0
        %1099 = vmatprep.subr.bf16.mxu0 0
        %1100 = vmatpush2.bf16.msra.mxu0 0
        %1101 = vmatprep.mubr.bf16.mxu0 0
        %1102 = vmatmul.mubr.bf16.gmra.mxu0 %v1034
        %v1103 = vpop.f32.mrf.mxu0
        %v1104 = vadd.f32 %v1006, %v1103
        %v1105 = vpop.f32.mrf.mxu0
        %v1106 = vpop.f32.mrf.mxu0
        %v1107 = vadd.f32 %v1006, %v1106
        %v1108 = vpop.f32.mrf.mxu0
        %1109 = vmatprep.mubr.bf16.mxu0 0
        %1110 = vmatmul.mubr.bf16.gmra.mxu0 %v1037
        %v1111 = vpop.f32.mrf.mxu0
        %v1112 = vadd.f32 %v1006, %v1111
        %v1113 = vpop.f32.mrf.mxu0
        %v1114 = vpop.f32.mrf.mxu0
        %v1115 = vadd.f32 %v1006, %v1114
        %v1116 = vpop.f32.mrf.mxu0
        %1117 = vmatprep.mubr.bf16.mxu0 0
        %1118 = vmatmul.mubr.bf16.gmra.mxu0 %v1040
        %v1119 = vpop.f32.mrf.mxu0
        %v1120 = vadd.f32 %v1006, %v1119
        %v1121 = vpop.f32.mrf.mxu0
        %v1122 = vpop.f32.mrf.mxu0
        %v1123 = vadd.f32 %v1006, %v1122
        %v1124 = vpop.f32.mrf.mxu0
        %1125 = vmatprep.mubr.bf16.mxu0 0
        %1126 = vmatmul.mubr.bf16.gmra.mxu0 %v1043
        %v1127 = vpop.f32.mrf.mxu0
        %v1128 = vadd.f32 %v1006, %v1127
        %v1129 = vpop.f32.mrf.mxu0
        %v1130 = vpop.f32.mrf.mxu0
        %v1131 = vadd.f32 %v1006, %v1130
        %v1132 = vpop.f32.mrf.mxu0
        %1133 = vmatprep.mubr.bf16.mxu0 0
        %1134 = vmatmul.mubr.bf16.gmra.mxu0 %v1046
        %v1135 = vpop.f32.mrf.mxu0
        %v1136 = vadd.f32 %v1006, %v1135
        %v1137 = vpop.f32.mrf.mxu0
        %v1138 = vpop.f32.mrf.mxu0
        %v1139 = vadd.f32 %v1006, %v1138
        %v1140 = vpop.f32.mrf.mxu0
        %1141 = vmatprep.mubr.bf16.mxu0 0
        %1142 = vmatmul.mubr.bf16.gmra.mxu0 %v1049
        %v1143 = vpop.f32.mrf.mxu0
        %v1144 = vadd.f32 %v1006, %v1143
        %v1145 = vpop.f32.mrf.mxu0
        %v1146 = vpop.f32.mrf.mxu0
        %v1147 = vadd.f32 %v1006, %v1146
        %v1148 = vpop.f32.mrf.mxu0
        %1149 = vmatprep.mubr.bf16.mxu0 0
        %1150 = vmatmul.mubr.bf16.gmra.mxu0 %v1052
        %v1151 = vpop.f32.mrf.mxu0
        %v1152 = vadd.f32 %v1006, %v1151
        %v1153 = vpop.f32.mrf.mxu0
        %v1154 = vpop.f32.mrf.mxu0
        %v1155 = vadd.f32 %v1006, %v1154
        %v1156 = vpop.f32.mrf.mxu0
        %1157 = vmatprep.mubr.bf16.mxu0 0
        %1158 = vmatmul.mubr.bf16.gmra.mxu0 %v1055
        %v1159 = vpop.f32.mrf.mxu0
        %v1160 = vadd.f32 %v1006, %v1159
        %v1161 = vpop.f32.mrf.mxu0
        %v1162 = vpop.f32.mrf.mxu0
        %v1163 = vadd.f32 %v1006, %v1162
        %v1164 = vpop.f32.mrf.mxu0
        %1165 = vmatprep.mubr.bf16.mxu0 0
        %1166 = vmatmul.mubr.bf16.gmra.mxu0 %v1058
        %v1167 = vpop.f32.mrf.mxu0
        %v1168 = vadd.f32 %v1006, %v1167
        %v1169 = vpop.f32.mrf.mxu0
        %v1170 = vpop.f32.mrf.mxu0
        %v1171 = vadd.f32 %v1006, %v1170
        %v1172 = vpop.f32.mrf.mxu0
        %1173 = vmatprep.mubr.bf16.mxu0 0
        %1174 = vmatmul.mubr.bf16.gmra.mxu0 %v1061
        %v1175 = vpop.f32.mrf.mxu0
        %v1176 = vadd.f32 %v1006, %v1175
        %v1177 = vpop.f32.mrf.mxu0
        %v1178 = vpop.f32.mrf.mxu0
        %v1179 = vadd.f32 %v1006, %v1178
        %v1180 = vpop.f32.mrf.mxu0
        %1181 = vmatprep.mubr.bf16.mxu0 0
        %1182 = vmatmul.mubr.bf16.gmra.mxu0 %v1064
        %v1183 = vpop.f32.mrf.mxu0
        %v1184 = vadd.f32 %v1006, %v1183
        %v1185 = vpop.f32.mrf.mxu0
        %v1186 = vpop.f32.mrf.mxu0
        %v1187 = vadd.f32 %v1006, %v1186
        %v1188 = vpop.f32.mrf.mxu0
        %1189 = vmatprep.mubr.bf16.mxu0 0
        %1190 = vmatmul.mubr.bf16.gmra.mxu0 %v1067
        %v1191 = vpop.f32.mrf.mxu0
        %v1192 = vadd.f32 %v1006, %v1191
        %v1193 = vpop.f32.mrf.mxu0
        %v1194 = vpop.f32.mrf.mxu0
        %v1195 = vadd.f32 %v1006, %v1194
        %v1196 = vpop.f32.mrf.mxu0
        %1197 = vdwg.mxu0
        %vm1198 = vcmask 261120
        %1199 = vst.msk [vmem:[%s300] sm:$0xff] %vm1198, %v1104
        %1200 = vst.msk [vmem:[%s300 + $0x8] sm:$0xff] %vm1198, %v1107
        %1201 = vst.msk [vmem:[%s300 + $0x10] sm:$0xff] %vm1198, %v1112
        %1202 = vst.msk [vmem:[%s300 + $0x18] sm:$0xff] %vm1198, %v1115
        %1203 = vst.msk [vmem:[%s300 + $0x20] sm:$0xff] %vm1198, %v1120
        %1204 = vst.msk [vmem:[%s300 + $0x28] sm:$0xff] %vm1198, %v1123
        %1205 = vst.msk [vmem:[%s300 + $0x30] sm:$0xff] %vm1198, %v1128
        %1206 = vst.msk [vmem:[%s300 + $0x38] sm:$0xff] %vm1198, %v1131
        %1207 = vst.msk [vmem:[%s300 + $0x40] sm:$0xff] %vm1198, %v1136
        %1208 = vst.msk [vmem:[%s300 + $0x48] sm:$0xff] %vm1198, %v1139
        %1209 = vst.msk [vmem:[%s300 + $0x50] sm:$0xff] %vm1198, %v1144
        %1210 = vst.msk [vmem:[%s300 + $0x58] sm:$0xff] %vm1198, %v1147
        %1211 = vst.msk [vmem:[%s300 + $0x60] sm:$0xff] %vm1198, %v1152
        %1212 = vst.msk [vmem:[%s300 + $0x68] sm:$0xff] %vm1198, %v1155
        %1213 = vst.msk [vmem:[%s300 + $0x70] sm:$0xff] %vm1198, %v1160
        %1214 = vst.msk [vmem:[%s300 + $0x78] sm:$0xff] %vm1198, %v1163
        %1215 = vst.msk [vmem:[%s300 + $0x80] sm:$0xff] %vm1198, %v1168
        %1216 = vst.msk [vmem:[%s300 + $0x88] sm:$0xff] %vm1198, %v1171
        %1217 = vst.msk [vmem:[%s300 + $0x90] sm:$0xff] %vm1198, %v1176
        %1218 = vst.msk [vmem:[%s300 + $0x98] sm:$0xff] %vm1198, %v1179
        %1219 = vst.msk [vmem:[%s300 + $0xa0] sm:$0xff] %vm1198, %v1184
        %1220 = vst.msk [vmem:[%s300 + $0xa8] sm:$0xff] %vm1198, %v1187
        %1221 = vst.msk [vmem:[%s300 + $0xb0] sm:$0xff] %vm1198, %v1192
        %1222 = vst.msk [vmem:[%s300 + $0xb8] sm:$0xff] %vm1198, %v1195
        %s1223 = sand.u32 %s181, 1
        %s1224 = sand.u32 %s181, 1
        %s1225 = smul.addr %s1224, 192
        %s1226 = scalar_lea.vmem [#allocation4], %s1225
        // Predicated region
        $region53: #{tpu_custom_call.1} parent=47 // pred_check
          %p1227 = pneg %p191
        $region54: #{tpu_custom_call.1} parent=47 // pred_check_branch
          %1229 = sbr.rel (%p1227) target = $region56
        $region55: #{tpu_custom_call.1} parent=47 // pred_region
          %s1230 = smul.u32 24, %s21
          %s1231 = ssub.s32 25, %s1230
          %p1232 = scmp.lt.s32.totalorder %s1231, 24
          %s1233 = scalar_select %p1232, %s1231, 24
          %s1234 = smul.u32 128, %s1233
          %p1235 = scmp.ne.s32.totalorder 0, %s1234
          %s1236 = smul.addr %s1230, 8
          %s1237 = scalar_lea.vmem %s7, %s1236
          // Predicated region
          $region57: #{tpu_custom_call.1} parent=55 // pred_check
            %p1238 = pneg %p1235
          $region58: #{tpu_custom_call.1} parent=55 // pred_check_branch
            %1240 = sbr.rel (%p1238) target = $region60
          $region59: #{tpu_custom_call.1} parent=55 // pred_region
            // Predicated region
            $region61: #{tpu_custom_call.1} parent=59 // pred_check
              _
            $region62: #{tpu_custom_call.1} parent=59 // pred_check_branch
              %1242 = sbr.rel (0) target = $region64
            $region63: #{tpu_custom_call.1} parent=59 // pred_region
              // Predicated region
              $region83: #{tpu_custom_call.1} parent=63 // pred_check
                _
              $region84: #{tpu_custom_call.1} parent=63 // pred_check_branch
                %1339 = sbr.rel (0) target = $region86
              $region85: #{tpu_custom_call.1} parent=63 // pred_region
                %s1340 = sdiv.u32.pop %s1233, 24
                %s1341 = srem.u32.pop %s1233, 24
                // While loop
                $region87: #{tpu_custom_call.1} parent=85 // loop_pre_header
                  _
                $region88: #{tpu_custom_call.1} parent=85 // loop_header
                  %s1343 = sphi 0, %s1345
                  %p1344 = scmp.ge.s32.totalorder %s1343, %s1340
                  %s1348 = sphi 0, %s1401
                  %s1349 = sphi %s1226, %s1404
                  %s1350 = sphi %s1237, %s1405
                $region89: #{tpu_custom_call.1} parent=85 // loop_header_branch
                  %1347 = sbr.rel (%p1344) target = $region93
                $region90: #{tpu_custom_call.1} parent=85 // loop_body
                  %v1351 = vld [vmem:[%s1349] sm:$0xff]
                  %1352 = vst [vmem:[%s1350] sm:$0xff] %v1351
                  %v1353 = vld [vmem:[%s1349 + $0x8] sm:$0xff]
                  %1354 = vst [vmem:[%s1350 + $0x8] sm:$0xff] %v1353
                  %v1355 = vld [vmem:[%s1349 + $0x10] sm:$0xff]
                  %1356 = vst [vmem:[%s1350 + $0x10] sm:$0xff] %v1355
                  %v1357 = vld [vmem:[%s1349 + $0x18] sm:$0xff]
                  %1358 = vst [vmem:[%s1350 + $0x18] sm:$0xff] %v1357
                  %v1359 = vld [vmem:[%s1349 + $0x20] sm:$0xff]
                  %1360 = vst [vmem:[%s1350 + $0x20] sm:$0xff] %v1359
                  %v1361 = vld [vmem:[%s1349 + $0x28] sm:$0xff]
                  %1362 = vst [vmem:[%s1350 + $0x28] sm:$0xff] %v1361
                  %v1363 = vld [vmem:[%s1349 + $0x30] sm:$0xff]
                  %1364 = vst [vmem:[%s1350 + $0x30] sm:$0xff] %v1363
                  %v1365 = vld [vmem:[%s1349 + $0x38] sm:$0xff]
                  %1366 = vst [vmem:[%s1350 + $0x38] sm:$0xff] %v1365
                  %v1367 = vld [vmem:[%s1349 + $0x40] sm:$0xff]
                  %1368 = vst [vmem:[%s1350 + $0x40] sm:$0xff] %v1367
                  %v1369 = vld [vmem:[%s1349 + $0x48] sm:$0xff]
                  %1370 = vst [vmem:[%s1350 + $0x48] sm:$0xff] %v1369
                  %v1371 = vld [vmem:[%s1349 + $0x50] sm:$0xff]
                  %1372 = vst [vmem:[%s1350 + $0x50] sm:$0xff] %v1371
                  %v1373 = vld [vmem:[%s1349 + $0x58] sm:$0xff]
                  %1374 = vst [vmem:[%s1350 + $0x58] sm:$0xff] %v1373
                  %v1375 = vld [vmem:[%s1349 + $0x60] sm:$0xff]
                  %1376 = vst [vmem:[%s1350 + $0x60] sm:$0xff] %v1375
                  %v1377 = vld [vmem:[%s1349 + $0x68] sm:$0xff]
                  %1378 = vst [vmem:[%s1350 + $0x68] sm:$0xff] %v1377
                  %v1379 = vld [vmem:[%s1349 + $0x70] sm:$0xff]
                  %1380 = vst [vmem:[%s1350 + $0x70] sm:$0xff] %v1379
                  %v1381 = vld [vmem:[%s1349 + $0x78] sm:$0xff]
                  %1382 = vst [vmem:[%s1350 + $0x78] sm:$0xff] %v1381
                  %v1383 = vld [vmem:[%s1349 + $0x80] sm:$0xff]
                  %1384 = vst [vmem:[%s1350 + $0x80] sm:$0xff] %v1383
                  %v1385 = vld [vmem:[%s1349 + $0x88] sm:$0xff]
                  %1386 = vst [vmem:[%s1350 + $0x88] sm:$0xff] %v1385
                  %v1387 = vld [vmem:[%s1349 + $0x90] sm:$0xff]
                  %1388 = vst [vmem:[%s1350 + $0x90] sm:$0xff] %v1387
                  %v1389 = vld [vmem:[%s1349 + $0x98] sm:$0xff]
                  %1390 = vst [vmem:[%s1350 + $0x98] sm:$0xff] %v1389
                  %v1391 = vld [vmem:[%s1349 + $0xa0] sm:$0xff]
                  %1392 = vst [vmem:[%s1350 + $0xa0] sm:$0xff] %v1391
                  %v1393 = vld [vmem:[%s1349 + $0xa8] sm:$0xff]
                  %1394 = vst [vmem:[%s1350 + $0xa8] sm:$0xff] %v1393
                  %v1395 = vld [vmem:[%s1349 + $0xb0] sm:$0xff]
                  %1396 = vst [vmem:[%s1350 + $0xb0] sm:$0xff] %v1395
                  %v1397 = vld [vmem:[%s1349 + $0xb8] sm:$0xff]
                  %1398 = vst [vmem:[%s1350 + $0xb8] sm:$0xff] %v1397
                  %s1399 = sadd.s32 1, %s1348
                  %p1400 = scmp.ge.s32.totalorder %s1399, %s1340
                  %s1401 = scalar_select %p1400, 0, %s1399
                  %s1402 = smul.u32 %s1401, 192
                  %s1403 = smul.u32 %s1401, 192
                  %s1404 = scalar_lea.vmem %s1226, %s1402 [#allocation4]
                  %s1405 = scalar_lea.vmem %s1237, %s1403
                $region91: #{tpu_custom_call.1} parent=85 // loop_footer
                  %s1345 = sadd.s32 %s1343, 1
                $region92: #{tpu_custom_call.1} parent=85 // loop_footer_branch
                  %1342 = sbr.rel target = $region88
                $region93: #{tpu_custom_call.1} parent=85 // loop_exit
                  _
                %s1406 = sdiv.u32.pop %s1233, 24
                %s1407 = srem.u32.pop %s1233, 24
                %s1408 = smul.u32 %s1406, 24
                %s1409 = smul.u32 8, %s1408
                %s1410 = scalar_lea.vmem %s1226, %s1409 [#allocation4]
                %s1411 = smul.u32 8, %s1408
                %s1412 = scalar_lea.vmem %s1237, %s1411
                // While loop
                $region94: #{tpu_custom_call.1} parent=85 // loop_pre_header
                  _
                $region95: #{tpu_custom_call.1} parent=85 // loop_header
                  %s1414 = sphi 0, %s1416
                  %p1415 = scmp.ge.s32.totalorder %s1414, %s1407
                  %s1419 = sphi 0, %s1426
                  %s1420 = sphi %s1410, %s1429
                  %s1421 = sphi %s1412, %s1430
                $region96: #{tpu_custom_call.1} parent=85 // loop_header_branch
                  %1418 = sbr.rel (%p1415) target = $region100
                $region97: #{tpu_custom_call.1} parent=85 // loop_body
                  %v1422 = vld [vmem:[%s1420] sm:$0xff]
                  %1423 = vst [vmem:[%s1421] sm:$0xff] %v1422
                  %s1424 = sadd.s32 1, %s1419
                  %p1425 = scmp.ge.s32.totalorder %s1424, %s1407
                  %s1426 = scalar_select %p1425, 0, %s1424
                  %s1427 = smul.u32 %s1426, 8
                  %s1428 = smul.u32 %s1426, 8
                  %s1429 = scalar_lea.vmem %s1410, %s1427 [#allocation4]
                  %s1430 = scalar_lea.vmem %s1412, %s1428
                $region98: #{tpu_custom_call.1} parent=85 // loop_footer
                  %s1416 = sadd.s32 %s1414, 1
                $region99: #{tpu_custom_call.1} parent=85 // loop_footer_branch
                  %1413 = sbr.rel target = $region95
                $region100: #{tpu_custom_call.1} parent=85 // loop_exit
                  _
              $region86: #{tpu_custom_call.1} parent=63 // pred_fallthru
                _
              // Predicated region
              $region101: #{tpu_custom_call.1} parent=63 // pred_check
                _
              $region102: #{tpu_custom_call.1} parent=63 // pred_check_branch
                %1432 = sbr.rel target = $region104
              $region103: #{tpu_custom_call.1} parent=63 // pred_region
                _
              $region104: #{tpu_custom_call.1} parent=63 // pred_fallthru
                _
            $region64: #{tpu_custom_call.1} parent=59 // pred_fallthru
              _
            // Predicated region
            $region65: #{tpu_custom_call.1} parent=59 // pred_check
              _
            $region66: #{tpu_custom_call.1} parent=59 // pred_check_branch
              %1244 = sbr.rel target = $region68
            $region67: #{tpu_custom_call.1} parent=59 // pred_region
              %s1246 = ssub.s32 256, 1
              %s1247 = sdiv.u32.pop %s1233, 24
              %s1248 = srem.u32.pop %s1233, 24
              // While loop
              $region69: #{tpu_custom_call.1} parent=67 // loop_pre_header
                _
              $region70: #{tpu_custom_call.1} parent=67 // loop_header
                %s1250 = sphi 0, %s1252
                %p1251 = scmp.ge.s32.totalorder %s1250, %s1247
                %s1255 = sphi 0, %s1308
                %s1256 = sphi %s1226, %s1311
                %s1257 = sphi %s1237, %s1312
              $region71: #{tpu_custom_call.1} parent=67 // loop_header_branch
                %1254 = sbr.rel (%p1251) target = $region75
              $region72: #{tpu_custom_call.1} parent=67 // loop_body
                %v1258 = vld [vmem:[%s1256] sm:%s1246]
                %1259 = vst [vmem:[%s1257] sm:%s1246] %v1258
                %v1260 = vld [vmem:[%s1256 + $0x8] sm:%s1246]
                %1261 = vst [vmem:[%s1257 + $0x8] sm:%s1246] %v1260
                %v1262 = vld [vmem:[%s1256 + $0x10] sm:%s1246]
                %1263 = vst [vmem:[%s1257 + $0x10] sm:%s1246] %v1262
                %v1264 = vld [vmem:[%s1256 + $0x18] sm:%s1246]
                %1265 = vst [vmem:[%s1257 + $0x18] sm:%s1246] %v1264
                %v1266 = vld [vmem:[%s1256 + $0x20] sm:%s1246]
                %1267 = vst [vmem:[%s1257 + $0x20] sm:%s1246] %v1266
                %v1268 = vld [vmem:[%s1256 + $0x28] sm:%s1246]
                %1269 = vst [vmem:[%s1257 + $0x28] sm:%s1246] %v1268
                %v1270 = vld [vmem:[%s1256 + $0x30] sm:%s1246]
                %1271 = vst [vmem:[%s1257 + $0x30] sm:%s1246] %v1270
                %v1272 = vld [vmem:[%s1256 + $0x38] sm:%s1246]
                %1273 = vst [vmem:[%s1257 + $0x38] sm:%s1246] %v1272
                %v1274 = vld [vmem:[%s1256 + $0x40] sm:%s1246]
                %1275 = vst [vmem:[%s1257 + $0x40] sm:%s1246] %v1274
                %v1276 = vld [vmem:[%s1256 + $0x48] sm:%s1246]
                %1277 = vst [vmem:[%s1257 + $0x48] sm:%s1246] %v1276
                %v1278 = vld [vmem:[%s1256 + $0x50] sm:%s1246]
                %1279 = vst [vmem:[%s1257 + $0x50] sm:%s1246] %v1278
                %v1280 = vld [vmem:[%s1256 + $0x58] sm:%s1246]
                %1281 = vst [vmem:[%s1257 + $0x58] sm:%s1246] %v1280
                %v1282 = vld [vmem:[%s1256 + $0x60] sm:%s1246]
                %1283 = vst [vmem:[%s1257 + $0x60] sm:%s1246] %v1282
                %v1284 = vld [vmem:[%s1256 + $0x68] sm:%s1246]
                %1285 = vst [vmem:[%s1257 + $0x68] sm:%s1246] %v1284
                %v1286 = vld [vmem:[%s1256 + $0x70] sm:%s1246]
                %1287 = vst [vmem:[%s1257 + $0x70] sm:%s1246] %v1286
                %v1288 = vld [vmem:[%s1256 + $0x78] sm:%s1246]
                %1289 = vst [vmem:[%s1257 + $0x78] sm:%s1246] %v1288
                %v1290 = vld [vmem:[%s1256 + $0x80] sm:%s1246]
                %1291 = vst [vmem:[%s1257 + $0x80] sm:%s1246] %v1290
                %v1292 = vld [vmem:[%s1256 + $0x88] sm:%s1246]
                %1293 = vst [vmem:[%s1257 + $0x88] sm:%s1246] %v1292
                %v1294 = vld [vmem:[%s1256 + $0x90] sm:%s1246]
                %1295 = vst [vmem:[%s1257 + $0x90] sm:%s1246] %v1294
                %v1296 = vld [vmem:[%s1256 + $0x98] sm:%s1246]
                %1297 = vst [vmem:[%s1257 + $0x98] sm:%s1246] %v1296
                %v1298 = vld [vmem:[%s1256 + $0xa0] sm:%s1246]
                %1299 = vst [vmem:[%s1257 + $0xa0] sm:%s1246] %v1298
                %v1300 = vld [vmem:[%s1256 + $0xa8] sm:%s1246]
                %1301 = vst [vmem:[%s1257 + $0xa8] sm:%s1246] %v1300
                %v1302 = vld [vmem:[%s1256 + $0xb0] sm:%s1246]
                %1303 = vst [vmem:[%s1257 + $0xb0] sm:%s1246] %v1302
                %v1304 = vld [vmem:[%s1256 + $0xb8] sm:%s1246]
                %1305 = vst [vmem:[%s1257 + $0xb8] sm:%s1246] %v1304
                %s1306 = sadd.s32 1, %s1255
                %p1307 = scmp.ge.s32.totalorder %s1306, %s1247
                %s1308 = scalar_select %p1307, 0, %s1306
                %s1309 = smul.u32 %s1308, 192
                %s1310 = smul.u32 %s1308, 192
                %s1311 = scalar_lea.vmem %s1226, %s1309 [#allocation4]
                %s1312 = scalar_lea.vmem %s1237, %s1310
              $region73: #{tpu_custom_call.1} parent=67 // loop_footer
                %s1252 = sadd.s32 %s1250, 1
              $region74: #{tpu_custom_call.1} parent=67 // loop_footer_branch
                %1249 = sbr.rel target = $region70
              $region75: #{tpu_custom_call.1} parent=67 // loop_exit
                _
              %s1313 = sdiv.u32.pop %s1233, 24
              %s1314 = srem.u32.pop %s1233, 24
              %s1315 = smul.u32 %s1313, 24
              %s1316 = smul.u32 8, %s1315
              %s1317 = scalar_lea.vmem %s1226, %s1316 [#allocation4]
              %s1318 = smul.u32 8, %s1315
              %s1319 = scalar_lea.vmem %s1237, %s1318
              // While loop
              $region76: #{tpu_custom_call.1} parent=67 // loop_pre_header
                _
              $region77: #{tpu_custom_call.1} parent=67 // loop_header
                %s1321 = sphi 0, %s1323
                %p1322 = scmp.ge.s32.totalorder %s1321, %s1314
                %s1326 = sphi 0, %s1333
                %s1327 = sphi %s1317, %s1336
                %s1328 = sphi %s1319, %s1337
              $region78: #{tpu_custom_call.1} parent=67 // loop_header_branch
                %1325 = sbr.rel (%p1322) target = $region82
              $region79: #{tpu_custom_call.1} parent=67 // loop_body
                %v1329 = vld [vmem:[%s1327] sm:%s1246]
                %1330 = vst [vmem:[%s1328] sm:%s1246] %v1329
                %s1331 = sadd.s32 1, %s1326
                %p1332 = scmp.ge.s32.totalorder %s1331, %s1314
                %s1333 = scalar_select %p1332, 0, %s1331
                %s1334 = smul.u32 %s1333, 8
                %s1335 = smul.u32 %s1333, 8
                %s1336 = scalar_lea.vmem %s1317, %s1334 [#allocation4]
                %s1337 = scalar_lea.vmem %s1319, %s1335
              $region80: #{tpu_custom_call.1} parent=67 // loop_footer
                %s1323 = sadd.s32 %s1321, 1
              $region81: #{tpu_custom_call.1} parent=67 // loop_footer_branch
                %1320 = sbr.rel target = $region77
              $region82: #{tpu_custom_call.1} parent=67 // loop_exit
                _
            $region68: #{tpu_custom_call.1} parent=59 // pred_fallthru
              _
          $region60: #{tpu_custom_call.1} parent=55 // pred_fallthru
            _
          %1433 = vnop
        $region56: #{tpu_custom_call.1} parent=47 // pred_fallthru
          _
      $region48: #{tpu_custom_call.1} parent=5 // pred_fallthru
        _
      %p1434 = scmp.le.s32.totalorder 2, %s16
      // Predicated region
      $region105: #{tpu_custom_call.1} parent=5 // pred_check
        %p1435 = pneg %p1434
      $region106: #{tpu_custom_call.1} parent=5 // pred_check_branch
        %1437 = sbr.rel (%p1435) target = $region108
      $region107: #{tpu_custom_call.1} parent=5 // pred_region
        %s1438 = ssub.s32 %s16, 2
        // Predicated region
        $region109: #{tpu_custom_call.1} parent=107 // pred_check
          %p1439 = pneg %p197
        $region110: #{tpu_custom_call.1} parent=107 // pred_check_branch
          %1441 = sbr.rel (%p1439) target = $region112
        $region111: #{tpu_custom_call.1} parent=107 // pred_region
          %s1442 = sand.u32 %s182, 1
          %s1443 = sand.u32 %s182, 1
          %s1444 = smul.addr %s1443, 192
          %s1445 = scalar_lea.vmem [#allocation4], %s1444
        $region112: #{tpu_custom_call.1} parent=107 // pred_fallthru
          _
      $region108: #{tpu_custom_call.1} parent=5 // pred_fallthru
        _
    $region6: #{tpu_custom_call.1} parent=1 // loop_footer
      %s20 = sadd.s32 1, %s16
    $region7: #{tpu_custom_call.1} parent=1 // loop_footer_branch
      %15 = sbr.rel target = $region3
    $region8: #{tpu_custom_call.1} parent=1 // loop_exit
      _
    %1446 = vsyncpa [#allocation3], 1
    %s1447 = scalar_lea.sflag [#allocation3], 1
    %1448 = vsyncpa %s1447, 1

</llo_original>
